<compile_context>
chip_gen: v6e
topology: v6e:2x2x1
jax: 0.10.0
libtpu: 0.0.40
codegen_flags: <defaults>
</compile_context>

<pallas_src>
import functools

import jax
import jax.numpy as jnp
from jax.experimental import pallas as pl
from jax.experimental.pallas import tpu as pltpu

BN_EPS = 1e-5
KSIZE = 3  # sep_conv_3x3


def _fused_sepconv_kernel(x_ref, dwf1_ref, pwf1_ref, dwf2_ref, pwf2_ref,
                          o_ref, xpad_ref, *, N, H, W, C):
    """Fully fused SepConv(3x3) x 2 in a lane-dense (N*H, W*C) layout.

    x_ref    : (N*H, W*C)      input activations (NHWC flattened, W*C == 128)
    dwf*_ref : (3, 3, W*C)     depthwise weights broadcast per lane, roll-wrap columns zeroed
    pwf*_ref : (2C-1, W*C)     pointwise weights arranged per lane-roll distance
    o_ref    : (N*H, W*C)      output
    xpad_ref : (N, H+2, W*C)   VMEM scratch holding the H-padded, ReLU'd stage input
    """
    WC = W * C
    NH = N * H
    inv_cnt = 1.0 / float(N * H * W)

    def channel_tree_sum(v):
        # v: (1, WC) per-lane partial sums. Lane-roll doubling by multiples of C gives the
        # per-channel total broadcast into every lane (requires W to be a power of two).
        s = v
        step = C
        while step < WC:
            s = s + pltpu.roll(s, step, axis=1)
            step *= 2
        return s

    def stage(x2, dwf_ref, pwf_ref):
        # ReLU (relu(0) == 0, so applying it before zero-padding matches PyTorch ordering).
        xr = jnp.maximum(x2, 0.0)

        # In-kernel zero padding of the H axis into the VMEM scratch.
        zrow = jnp.zeros((N, 1, WC), jnp.float32)
        xpad_ref[:, 0:1, :] = zrow
        xpad_ref[:, H + 1:H + 2, :] = zrow
        xpad_ref[:, 1:H + 1, :] = xr.reshape(N, H, WC)

        # Depthwise 3x3 (stride 1): H taps read directly from the padded scratch ref,
        # W taps are lane rolls by +/-C; wrap-around columns are zeroed in dwf.
        acc = jnp.zeros((NH, WC), jnp.float32)
        for kh in range(KSIZE):
            xs = xpad_ref[:, kh:kh + H, :].reshape(NH, WC)
            for kw in range(KSIZE):
                shift = (-(kw - 1) * C) % WC
                t = pltpu.roll(xs, shift, axis=1) if shift else xs
                acc = acc + t * dwf_ref[kh, kw, :]

        # Pointwise 1x1 conv as 2C-1 lane-rolled VPU MACs (C is tiny -> skip the MXU).
        y = jnp.zeros((NH, WC), jnp.float32)
        for d in range(-(C - 1), C):
            shift = d % WC
            t = pltpu.roll(acc, shift, axis=1) if shift else acc
            y = y + t * pwf_ref[d + C - 1, :]

        # BatchNorm2d(affine=False), training mode: per-channel batch mean / biased variance
        # over the N*H*W positions, eps = 1e-5. Stats are broadcast into every lane.
        mean = channel_tree_sum(jnp.sum(y, axis=0, keepdims=True)) * inv_cnt
        yc = y - mean
        var = channel_tree_sum(jnp.sum(yc * yc, axis=0, keepdims=True)) * inv_cnt
        return yc * jax.lax.rsqrt(var + BN_EPS)

    y1 = stage(x_ref[...], dwf1_ref, pwf1_ref)
    y2 = stage(y1, dwf2_ref, pwf2_ref)
    o_ref[...] = y2.astype(o_ref.dtype)


def _flatten_dw(dw, W):
    """(3,3,C) depthwise filter -> (3,3,W*C) per-lane weights for the flat lane axis.

    Columns that a W-direction lane roll would wrap around the image edge are zeroed, which
    implements the zero padding in W without padding the lane axis."""
    _, Kw, C = dw.shape
    WC = W * C
    dwf = jnp.tile(dw, (1, 1, W))                       # lane w*C + c holds dw[..., c]
    w_of_lane = jnp.arange(WC) // C
    left = (w_of_lane != 0).astype(dw.dtype)            # kw offset -1 is invalid at w == 0
    right = (w_of_lane != W - 1).astype(dw.dtype)       # kw offset +1 is invalid at w == W-1
    dwf = dwf.at[:, 0, :].multiply(left)
    dwf = dwf.at[:, Kw - 1, :].multiply(right)
    return dwf


def _flatten_pw(pw, W):
    """(C_in, C_out) pointwise filter -> (2C-1, W*C) per-lane-roll weights.

    Row (d + C - 1), lane w*C + co holds pw[co - d, co] (0 when co - d is out of range), so the
    1x1 conv becomes sum_d roll(acc, d) * pwf[d + C - 1]."""
    C = pw.shape[0]
    d = jnp.arange(2 * C - 1) - (C - 1)                 # (2C-1,)
    co = jnp.arange(C)                                  # (C,)
    ci = co[None, :] - d[:, None]                       # (2C-1, C)
    valid = (ci >= 0) & (ci < C)
    g = pw[jnp.clip(ci, 0, C - 1), co[None, :]] * valid.astype(pw.dtype)
    return jnp.tile(g, (1, W))                          # (2C-1, W*C)


def sepconv3x3_fused(x_nhwc, dw1, pw1, dw2, pw2):
    """Both SepConv stages as a single fused, lane-dense Pallas kernel."""
    N, H, W, C = x_nhwc.shape
    WC = W * C
    # Lane-dense layout constraints of this kernel (satisfied by the test shape 2x16x16x8).
    # TODO(synk): generalize (tile/pad the lane axis) for W*C != 128 or non-power-of-two W.
    assert WC == 128 and (W & (W - 1)) == 0 and H % 8 == 0

    kernel = functools.partial(_fused_sepconv_kernel, N=N, H=H, W=W, C=C)
    x2 = x_nhwc.reshape(N * H, WC)
    out2 = pl.pallas_call(
        kernel,
        out_shape=jax.ShapeDtypeStruct((N * H, WC), jnp.float32),
        in_specs=[pl.BlockSpec(memory_space=pltpu.MemorySpace.VMEM)] * 5,
        out_specs=pl.BlockSpec(memory_space=pltpu.MemorySpace.VMEM),
        scratch_shapes=[pltpu.VMEM((N, H + 2, WC), jnp.float32)],
        compiler_params=pltpu.CompilerParams(vmem_limit_bytes=32 * 1024 * 1024),
    )(x2, _flatten_dw(dw1, W), _flatten_pw(pw1, W),
      _flatten_dw(dw2, W), _flatten_pw(pw2, W))
    return out2.reshape(N, H, W, C)


class OpPallas:
    """JAX/Pallas equivalent of decode_network.Op(C, stride, idx) with idx -> 'sep_conv_3x3'."""

    def __init__(self, C, stride, idx, key):
        # PRIMITIVES = ['none','max_pool_3x3','avg_pool_3x3','skip_connect',
        #               'sep_conv_3x3','sep_conv_5x5','dil_conv_3x3','dil_conv_5x5']
        assert idx == 4, "only 'sep_conv_3x3' (idx=4) is implemented"
        assert stride == 1  # TODO(synk): strided depthwise conv not implemented in the kernel.
        self.C = C
        k1, k2, k3, k4 = jax.random.split(key, 4)
        # Deterministic synthetic weights. PyTorch Conv2d weight shapes:
        #   depthwise: (C, 1, 3, 3) -> stored here as (3, 3, C)
        #   pointwise: (C, C, 1, 1) -> stored here as (C_in, C_out)
        self.dw1 = 0.1 * jax.random.normal(k1, (3, 3, C), jnp.float32)
        self.pw1 = 0.1 * jax.random.normal(k2, (C, C), jnp.float32)
        self.dw2 = 0.1 * jax.random.normal(k3, (3, 3, C), jnp.float32)
        self.pw2 = 0.1 * jax.random.normal(k4, (C, C), jnp.float32)

    def __call__(self, x_nhwc):
        # Keep operands in f32: bf16 helps v6e/v7x but hurts v5e's VPU and risks the tolerance.
        return sepconv3x3_fused(x_nhwc, self.dw1, self.pw1, self.dw2, self.pw2)


def _reference_stage(x, dw, pw):
    """Pure-JAX reference (lax conv) for one SepConv stage, for numerical verification."""
    N, H, W, C = x.shape
    r = jnp.maximum(x, 0.0)
    dn = ("NHWC", "HWIO", "NHWC")
    y = jax.lax.conv_general_dilated(
        r, dw.reshape(3, 3, 1, C), window_strides=(1, 1), padding=((1, 1), (1, 1)),
        dimension_numbers=dn, feature_group_count=C)
    y = jax.lax.conv_general_dilated(
        y, pw.reshape(1, 1, C, C), window_strides=(1, 1), padding="VALID",
        dimension_numbers=dn)
    mean = jnp.mean(y, axis=(0, 1, 2), keepdims=True)
    var = jnp.mean(jnp.square(y - mean), axis=(0, 1, 2), keepdims=True)
    return (y - mean) * jax.lax.rsqrt(var + BN_EPS)


if __name__ == "__main__":
    key = jax.random.PRNGKey(0)
    k_x, k_w = jax.random.split(key)

    N, C, H, W = 2, 8, 16, 16            # small shapes; W*C == 128 (lane-dense); layout NHWC
    x = jax.random.normal(k_x, (N, H, W, C), jnp.float32)

    op = OpPallas(C=C, stride=1, idx=4, key=k_w)

    out = jax.jit(op.__call__)(x)
    out = jax.block_until_ready(out)
    assert out.shape == (N, H, W, C) and out.dtype == jnp.float32

    # Numerical sanity check against a pure-JAX reference.
    ref = _reference_stage(_reference_stage(x, op.dw1, op.pw1), op.dw2, op.pw2)
    assert jnp.allclose(out, ref, atol=2e-4, rtol=2e-4)

    print("KERNEL_OK")
</pallas_src>

<mosaic_0001>
module attributes {stable_mosaic.version = 11 : i64} {
  func.func @_fused_sepconv_kernel(%arg0: memref<32x128xf32, #tpu.memory_space<vmem>>, %arg1: memref<3x3x128xf32, #tpu.memory_space<vmem>>, %arg2: memref<15x128xf32, #tpu.memory_space<vmem>>, %arg3: memref<3x3x128xf32, #tpu.memory_space<vmem>>, %arg4: memref<15x128xf32, #tpu.memory_space<vmem>>, %arg5: memref<32x128xf32, #tpu.memory_space<vmem>>, %arg6: memref<2x18x128xf32, #tpu.memory_space<vmem>>) attributes {dimension_semantics = [], scalar_prefetch = 0 : i64, scratch_operands = 1 : i64, tpu.core_type = #tpu.core_type<tc>} {
    %c0 = arith.constant 0 : index
    %c0_0 = arith.constant 0 : index
    %0 = vector.load %arg0[%c0, %c0_0] : memref<32x128xf32, #tpu.memory_space<vmem>>, vector<32x128xf32>
    %cst = arith.constant 0.000000e+00 : f32
    %1 = vector.broadcast %cst : f32 to vector<32x128xf32>
    %2 = arith.maximumf %0, %1 : vector<32x128xf32>
    %cst_1 = arith.constant 0.000000e+00 : f32
    %3 = vector.broadcast %cst_1 : f32 to vector<2x1x128xf32>
    %c0_2 = arith.constant 0 : index
    %c0_3 = arith.constant 0 : index
    %c0_4 = arith.constant 0 : index
    %4 = vector.load %arg6[%c0_2, %c0_3, %c0_4] : memref<2x18x128xf32, #tpu.memory_space<vmem>>, vector<2x1x128xf32>
    tpu.vector_store %arg6[%c0_2, %c0_3, %c0_4], %3 {strides = array<i32>} : memref<2x18x128xf32, #tpu.memory_space<vmem>>, vector<2x1x128xf32>,
    %c0_5 = arith.constant 0 : index
    %c17 = arith.constant 17 : index
    %c0_6 = arith.constant 0 : index
    %5 = vector.load %arg6[%c0_5, %c17, %c0_6] : memref<2x18x128xf32, #tpu.memory_space<vmem>>, vector<2x1x128xf32>
    tpu.vector_store %arg6[%c0_5, %c17, %c0_6], %3 {strides = array<i32>} : memref<2x18x128xf32, #tpu.memory_space<vmem>>, vector<2x1x128xf32>,
    %6 = vector.shape_cast %2 : vector<32x128xf32> to vector<2x16x128xf32>
    %c0_7 = arith.constant 0 : index
    %c1 = arith.constant 1 : index
    %c0_8 = arith.constant 0 : index
    %7 = vector.load %arg6[%c0_7, %c1, %c0_8] : memref<2x18x128xf32, #tpu.memory_space<vmem>>, vector<2x16x128xf32>
    tpu.vector_store %arg6[%c0_7, %c1, %c0_8], %6 {strides = array<i32>} : memref<2x18x128xf32, #tpu.memory_space<vmem>>, vector<2x16x128xf32>,
    %cst_9 = arith.constant 0.000000e+00 : f32
    %8 = vector.broadcast %cst_9 : f32 to vector<32x128xf32>
    %c0_10 = arith.constant 0 : index
    %c0_11 = arith.constant 0 : index
    %c0_12 = arith.constant 0 : index
    %9 = vector.load %arg6[%c0_10, %c0_11, %c0_12] : memref<2x18x128xf32, #tpu.memory_space<vmem>>, vector<2x16x128xf32>
    %10 = vector.shape_cast %9 : vector<2x16x128xf32> to vector<32x128xf32>
    %c8_i32 = arith.constant 8 : i32
    %11 = tpu.dynamic_rotate %10 by %c8_i32 dim 1 : vector<32x128xf32>, i32 -> vector<32x128xf32>
    %c0_13 = arith.constant 0 : index
    %c0_14 = arith.constant 0 : index
    %c0_15 = arith.constant 0 : index
    %12 = vector.load %arg1[%c0_13, %c0_14, %c0_15] : memref<3x3x128xf32, #tpu.memory_space<vmem>>, vector<1x1x128xf32>
    %13 = vector.shape_cast %12 : vector<1x1x128xf32> to vector<128xf32>
    %14 = vector.shape_cast %13 : vector<128xf32> to vector<1x128xf32>
    %15 = vector.broadcast %14 : vector<1x128xf32> to vector<32x128xf32>
    %16 = arith.mulf %11, %15 : vector<32x128xf32>
    %17 = arith.addf %8, %16 : vector<32x128xf32>
    %c0_16 = arith.constant 0 : index
    %c1_17 = arith.constant 1 : index
    %c0_18 = arith.constant 0 : index
    %18 = vector.load %arg1[%c0_16, %c1_17, %c0_18] : memref<3x3x128xf32, #tpu.memory_space<vmem>>, vector<1x1x128xf32>
    %19 = vector.shape_cast %18 : vector<1x1x128xf32> to vector<128xf32>
    %20 = vector.shape_cast %19 : vector<128xf32> to vector<1x128xf32>
    %21 = vector.broadcast %20 : vector<1x128xf32> to vector<32x128xf32>
    %22 = arith.mulf %10, %21 : vector<32x128xf32>
    %23 = arith.addf %17, %22 : vector<32x128xf32>
    %c120_i32 = arith.constant 120 : i32
    %24 = tpu.dynamic_rotate %10 by %c120_i32 dim 1 : vector<32x128xf32>, i32 -> vector<32x128xf32>
    %c0_19 = arith.constant 0 : index
    %c2 = arith.constant 2 : index
    %c0_20 = arith.constant 0 : index
    %25 = vector.load %arg1[%c0_19, %c2, %c0_20] : memref<3x3x128xf32, #tpu.memory_space<vmem>>, vector<1x1x128xf32>
    %26 = vector.shape_cast %25 : vector<1x1x128xf32> to vector<128xf32>
    %27 = vector.shape_cast %26 : vector<128xf32> to vector<1x128xf32>
    %28 = vector.broadcast %27 : vector<1x128xf32> to vector<32x128xf32>
    %29 = arith.mulf %24, %28 : vector<32x128xf32>
    %30 = arith.addf %23, %29 : vector<32x128xf32>
    %c0_21 = arith.constant 0 : index
    %c1_22 = arith.constant 1 : index
    %c0_23 = arith.constant 0 : index
    %31 = vector.load %arg6[%c0_21, %c1_22, %c0_23] : memref<2x18x128xf32, #tpu.memory_space<vmem>>, vector<2x16x128xf32>
    %32 = vector.shape_cast %31 : vector<2x16x128xf32> to vector<32x128xf32>
    %c8_i32_24 = arith.constant 8 : i32
    %33 = tpu.dynamic_rotate %32 by %c8_i32_24 dim 1 : vector<32x128xf32>, i32 -> vector<32x128xf32>
    %c1_25 = arith.constant 1 : index
    %c0_26 = arith.constant 0 : index
    %c0_27 = arith.constant 0 : index
    %34 = vector.load %arg1[%c1_25, %c0_26, %c0_27] : memref<3x3x128xf32, #tpu.memory_space<vmem>>, vector<1x1x128xf32>
    %35 = vector.shape_cast %34 : vector<1x1x128xf32> to vector<128xf32>
    %36 = vector.shape_cast %35 : vector<128xf32> to vector<1x128xf32>
    %37 = vector.broadcast %36 : vector<1x128xf32> to vector<32x128xf32>
    %38 = arith.mulf %33, %37 : vector<32x128xf32>
    %39 = arith.addf %30, %38 : vector<32x128xf32>
    %c1_28 = arith.constant 1 : index
    %c1_29 = arith.constant 1 : index
    %c0_30 = arith.constant 0 : index
    %40 = vector.load %arg1[%c1_28, %c1_29, %c0_30] : memref<3x3x128xf32, #tpu.memory_space<vmem>>, vector<1x1x128xf32>
    %41 = vector.shape_cast %40 : vector<1x1x128xf32> to vector<128xf32>
    %42 = vector.shape_cast %41 : vector<128xf32> to vector<1x128xf32>
    %43 = vector.broadcast %42 : vector<1x128xf32> to vector<32x128xf32>
    %44 = arith.mulf %32, %43 : vector<32x128xf32>
    %45 = arith.addf %39, %44 : vector<32x128xf32>
    %c120_i32_31 = arith.constant 120 : i32
    %46 = tpu.dynamic_rotate %32 by %c120_i32_31 dim 1 : vector<32x128xf32>, i32 -> vector<32x128xf32>
    %c1_32 = arith.constant 1 : index
    %c2_33 = arith.constant 2 : index
    %c0_34 = arith.constant 0 : index
    %47 = vector.load %arg1[%c1_32, %c2_33, %c0_34] : memref<3x3x128xf32, #tpu.memory_space<vmem>>, vector<1x1x128xf32>
    %48 = vector.shape_cast %47 : vector<1x1x128xf32> to vector<128xf32>
    %49 = vector.shape_cast %48 : vector<128xf32> to vector<1x128xf32>
    %50 = vector.broadcast %49 : vector<1x128xf32> to vector<32x128xf32>
    %51 = arith.mulf %46, %50 : vector<32x128xf32>
    %52 = arith.addf %45, %51 : vector<32x128xf32>
    %c0_35 = arith.constant 0 : index
    %c2_36 = arith.constant 2 : index
    %c0_37 = arith.constant 0 : index
    %53 = vector.load %arg6[%c0_35, %c2_36, %c0_37] : memref<2x18x128xf32, #tpu.memory_space<vmem>>, vector<2x16x128xf32>
    %54 = vector.shape_cast %53 : vector<2x16x128xf32> to vector<32x128xf32>
    %c8_i32_38 = arith.constant 8 : i32
    %55 = tpu.dynamic_rotate %54 by %c8_i32_38 dim 1 : vector<32x128xf32>, i32 -> vector<32x128xf32>
    %c2_39 = arith.constant 2 : index
    %c0_40 = arith.constant 0 : index
    %c0_41 = arith.constant 0 : index
    %56 = vector.load %arg1[%c2_39, %c0_40, %c0_41] : memref<3x3x128xf32, #tpu.memory_space<vmem>>, vector<1x1x128xf32>
    %57 = vector.shape_cast %56 : vector<1x1x128xf32> to vector<128xf32>
    %58 = vector.shape_cast %57 : vector<128xf32> to vector<1x128xf32>
    %59 = vector.broadcast %58 : vector<1x128xf32> to vector<32x128xf32>
    %60 = arith.mulf %55, %59 : vector<32x128xf32>
    %61 = arith.addf %52, %60 : vector<32x128xf32>
    %c2_42 = arith.constant 2 : index
    %c1_43 = arith.constant 1 : index
    %c0_44 = arith.constant 0 : index
    %62 = vector.load %arg1[%c2_42, %c1_43, %c0_44] : memref<3x3x128xf32, #tpu.memory_space<vmem>>, vector<1x1x128xf32>
    %63 = vector.shape_cast %62 : vector<1x1x128xf32> to vector<128xf32>
    %64 = vector.shape_cast %63 : vector<128xf32> to vector<1x128xf32>
    %65 = vector.broadcast %64 : vector<1x128xf32> to vector<32x128xf32>
    %66 = arith.mulf %54, %65 : vector<32x128xf32>
    %67 = arith.addf %61, %66 : vector<32x128xf32>
    %c120_i32_45 = arith.constant 120 : i32
    %68 = tpu.dynamic_rotate %54 by %c120_i32_45 dim 1 : vector<32x128xf32>, i32 -> vector<32x128xf32>
    %c2_46 = arith.constant 2 : index
    %c2_47 = arith.constant 2 : index
    %c0_48 = arith.constant 0 : index
    %69 = vector.load %arg1[%c2_46, %c2_47, %c0_48] : memref<3x3x128xf32, #tpu.memory_space<vmem>>, vector<1x1x128xf32>
    %70 = vector.shape_cast %69 : vector<1x1x128xf32> to vector<128xf32>
    %71 = vector.shape_cast %70 : vector<128xf32> to vector<1x128xf32>
    %72 = vector.broadcast %71 : vector<1x128xf32> to vector<32x128xf32>
    %73 = arith.mulf %68, %72 : vector<32x128xf32>
    %74 = arith.addf %67, %73 : vector<32x128xf32>
    %cst_49 = arith.constant 0.000000e+00 : f32
    %75 = vector.broadcast %cst_49 : f32 to vector<32x128xf32>
    %c121_i32 = arith.constant 121 : i32
    %76 = tpu.dynamic_rotate %74 by %c121_i32 dim 1 : vector<32x128xf32>, i32 -> vector<32x128xf32>
    %c0_50 = arith.constant 0 : index
    %c0_51 = arith.constant 0 : index
    %77 = vector.load %arg2[%c0_50, %c0_51] : memref<15x128xf32, #tpu.memory_space<vmem>>, vector<1x128xf32>
    %78 = vector.shape_cast %77 : vector<1x128xf32> to vector<128xf32>
    %79 = vector.shape_cast %78 : vector<128xf32> to vector<1x128xf32>
    %80 = vector.broadcast %79 : vector<1x128xf32> to vector<32x128xf32>
    %81 = arith.mulf %76, %80 : vector<32x128xf32>
    %82 = arith.addf %75, %81 : vector<32x128xf32>
    %c122_i32 = arith.constant 122 : i32
    %83 = tpu.dynamic_rotate %74 by %c122_i32 dim 1 : vector<32x128xf32>, i32 -> vector<32x128xf32>
    %c1_52 = arith.constant 1 : index
    %c0_53 = arith.constant 0 : index
    %84 = vector.load %arg2[%c1_52, %c0_53] : memref<15x128xf32, #tpu.memory_space<vmem>>, vector<1x128xf32>
    %85 = vector.shape_cast %84 : vector<1x128xf32> to vector<128xf32>
    %86 = vector.shape_cast %85 : vector<128xf32> to vector<1x128xf32>
    %87 = vector.broadcast %86 : vector<1x128xf32> to vector<32x128xf32>
    %88 = arith.mulf %83, %87 : vector<32x128xf32>
    %89 = arith.addf %82, %88 : vector<32x128xf32>
    %c123_i32 = arith.constant 123 : i32
    %90 = tpu.dynamic_rotate %74 by %c123_i32 dim 1 : vector<32x128xf32>, i32 -> vector<32x128xf32>
    %c2_54 = arith.constant 2 : index
    %c0_55 = arith.constant 0 : index
    %91 = vector.load %arg2[%c2_54, %c0_55] : memref<15x128xf32, #tpu.memory_space<vmem>>, vector<1x128xf32>
    %92 = vector.shape_cast %91 : vector<1x128xf32> to vector<128xf32>
    %93 = vector.shape_cast %92 : vector<128xf32> to vector<1x128xf32>
    %94 = vector.broadcast %93 : vector<1x128xf32> to vector<32x128xf32>
    %95 = arith.mulf %90, %94 : vector<32x128xf32>
    %96 = arith.addf %89, %95 : vector<32x128xf32>
    %c124_i32 = arith.constant 124 : i32
    %97 = tpu.dynamic_rotate %74 by %c124_i32 dim 1 : vector<32x128xf32>, i32 -> vector<32x128xf32>
    %c3 = arith.constant 3 : index
    %c0_56 = arith.constant 0 : index
    %98 = vector.load %arg2[%c3, %c0_56] : memref<15x128xf32, #tpu.memory_space<vmem>>, vector<1x128xf32>
    %99 = vector.shape_cast %98 : vector<1x128xf32> to vector<128xf32>
    %100 = vector.shape_cast %99 : vector<128xf32> to vector<1x128xf32>
    %101 = vector.broadcast %100 : vector<1x128xf32> to vector<32x128xf32>
    %102 = arith.mulf %97, %101 : vector<32x128xf32>
    %103 = arith.addf %96, %102 : vector<32x128xf32>
    %c125_i32 = arith.constant 125 : i32
    %104 = tpu.dynamic_rotate %74 by %c125_i32 dim 1 : vector<32x128xf32>, i32 -> vector<32x128xf32>
    %c4 = arith.constant 4 : index
    %c0_57 = arith.constant 0 : index
    %105 = vector.load %arg2[%c4, %c0_57] : memref<15x128xf32, #tpu.memory_space<vmem>>, vector<1x128xf32>
    %106 = vector.shape_cast %105 : vector<1x128xf32> to vector<128xf32>
    %107 = vector.shape_cast %106 : vector<128xf32> to vector<1x128xf32>
    %108 = vector.broadcast %107 : vector<1x128xf32> to vector<32x128xf32>
    %109 = arith.mulf %104, %108 : vector<32x128xf32>
    %110 = arith.addf %103, %109 : vector<32x128xf32>
    %c126_i32 = arith.constant 126 : i32
    %111 = tpu.dynamic_rotate %74 by %c126_i32 dim 1 : vector<32x128xf32>, i32 -> vector<32x128xf32>
    %c5 = arith.constant 5 : index
    %c0_58 = arith.constant 0 : index
    %112 = vector.load %arg2[%c5, %c0_58] : memref<15x128xf32, #tpu.memory_space<vmem>>, vector<1x128xf32>
    %113 = vector.shape_cast %112 : vector<1x128xf32> to vector<128xf32>
    %114 = vector.shape_cast %113 : vector<128xf32> to vector<1x128xf32>
    %115 = vector.broadcast %114 : vector<1x128xf32> to vector<32x128xf32>
    %116 = arith.mulf %111, %115 : vector<32x128xf32>
    %117 = arith.addf %110, %116 : vector<32x128xf32>
    %c127_i32 = arith.constant 127 : i32
    %118 = tpu.dynamic_rotate %74 by %c127_i32 dim 1 : vector<32x128xf32>, i32 -> vector<32x128xf32>
    %c6 = arith.constant 6 : index
    %c0_59 = arith.constant 0 : index
    %119 = vector.load %arg2[%c6, %c0_59] : memref<15x128xf32, #tpu.memory_space<vmem>>, vector<1x128xf32>
    %120 = vector.shape_cast %119 : vector<1x128xf32> to vector<128xf32>
    %121 = vector.shape_cast %120 : vector<128xf32> to vector<1x128xf32>
    %122 = vector.broadcast %121 : vector<1x128xf32> to vector<32x128xf32>
    %123 = arith.mulf %118, %122 : vector<32x128xf32>
    %124 = arith.addf %117, %123 : vector<32x128xf32>
    %c7 = arith.constant 7 : index
    %c0_60 = arith.constant 0 : index
    %125 = vector.load %arg2[%c7, %c0_60] : memref<15x128xf32, #tpu.memory_space<vmem>>, vector<1x128xf32>
    %126 = vector.shape_cast %125 : vector<1x128xf32> to vector<128xf32>
    %127 = vector.shape_cast %126 : vector<128xf32> to vector<1x128xf32>
    %128 = vector.broadcast %127 : vector<1x128xf32> to vector<32x128xf32>
    %129 = arith.mulf %74, %128 : vector<32x128xf32>
    %130 = arith.addf %124, %129 : vector<32x128xf32>
    %c1_i32 = arith.constant 1 : i32
    %131 = tpu.dynamic_rotate %74 by %c1_i32 dim 1 : vector<32x128xf32>, i32 -> vector<32x128xf32>
    %c8 = arith.constant 8 : index
    %c0_61 = arith.constant 0 : index
    %132 = vector.load %arg2[%c8, %c0_61] : memref<15x128xf32, #tpu.memory_space<vmem>>, vector<1x128xf32>
    %133 = vector.shape_cast %132 : vector<1x128xf32> to vector<128xf32>
    %134 = vector.shape_cast %133 : vector<128xf32> to vector<1x128xf32>
    %135 = vector.broadcast %134 : vector<1x128xf32> to vector<32x128xf32>
    %136 = arith.mulf %131, %135 : vector<32x128xf32>
    %137 = arith.addf %130, %136 : vector<32x128xf32>
    %c2_i32 = arith.constant 2 : i32
    %138 = tpu.dynamic_rotate %74 by %c2_i32 dim 1 : vector<32x128xf32>, i32 -> vector<32x128xf32>
    %c9 = arith.constant 9 : index
    %c0_62 = arith.constant 0 : index
    %139 = vector.load %arg2[%c9, %c0_62] : memref<15x128xf32, #tpu.memory_space<vmem>>, vector<1x128xf32>
    %140 = vector.shape_cast %139 : vector<1x128xf32> to vector<128xf32>
    %141 = vector.shape_cast %140 : vector<128xf32> to vector<1x128xf32>
    %142 = vector.broadcast %141 : vector<1x128xf32> to vector<32x128xf32>
    %143 = arith.mulf %138, %142 : vector<32x128xf32>
    %144 = arith.addf %137, %143 : vector<32x128xf32>
    %c3_i32 = arith.constant 3 : i32
    %145 = tpu.dynamic_rotate %74 by %c3_i32 dim 1 : vector<32x128xf32>, i32 -> vector<32x128xf32>
    %c10 = arith.constant 10 : index
    %c0_63 = arith.constant 0 : index
    %146 = vector.load %arg2[%c10, %c0_63] : memref<15x128xf32, #tpu.memory_space<vmem>>, vector<1x128xf32>
    %147 = vector.shape_cast %146 : vector<1x128xf32> to vector<128xf32>
    %148 = vector.shape_cast %147 : vector<128xf32> to vector<1x128xf32>
    %149 = vector.broadcast %148 : vector<1x128xf32> to vector<32x128xf32>
    %150 = arith.mulf %145, %149 : vector<32x128xf32>
    %151 = arith.addf %144, %150 : vector<32x128xf32>
    %c4_i32 = arith.constant 4 : i32
    %152 = tpu.dynamic_rotate %74 by %c4_i32 dim 1 : vector<32x128xf32>, i32 -> vector<32x128xf32>
    %c11 = arith.constant 11 : index
    %c0_64 = arith.constant 0 : index
    %153 = vector.load %arg2[%c11, %c0_64] : memref<15x128xf32, #tpu.memory_space<vmem>>, vector<1x128xf32>
    %154 = vector.shape_cast %153 : vector<1x128xf32> to vector<128xf32>
    %155 = vector.shape_cast %154 : vector<128xf32> to vector<1x128xf32>
    %156 = vector.broadcast %155 : vector<1x128xf32> to vector<32x128xf32>
    %157 = arith.mulf %152, %156 : vector<32x128xf32>
    %158 = arith.addf %151, %157 : vector<32x128xf32>
    %c5_i32 = arith.constant 5 : i32
    %159 = tpu.dynamic_rotate %74 by %c5_i32 dim 1 : vector<32x128xf32>, i32 -> vector<32x128xf32>
    %c12 = arith.constant 12 : index
    %c0_65 = arith.constant 0 : index
    %160 = vector.load %arg2[%c12, %c0_65] : memref<15x128xf32, #tpu.memory_space<vmem>>, vector<1x128xf32>
    %161 = vector.shape_cast %160 : vector<1x128xf32> to vector<128xf32>
    %162 = vector.shape_cast %161 : vector<128xf32> to vector<1x128xf32>
    %163 = vector.broadcast %162 : vector<1x128xf32> to vector<32x128xf32>
    %164 = arith.mulf %159, %163 : vector<32x128xf32>
    %165 = arith.addf %158, %164 : vector<32x128xf32>
    %c6_i32 = arith.constant 6 : i32
    %166 = tpu.dynamic_rotate %74 by %c6_i32 dim 1 : vector<32x128xf32>, i32 -> vector<32x128xf32>
    %c13 = arith.constant 13 : index
    %c0_66 = arith.constant 0 : index
    %167 = vector.load %arg2[%c13, %c0_66] : memref<15x128xf32, #tpu.memory_space<vmem>>, vector<1x128xf32>
    %168 = vector.shape_cast %167 : vector<1x128xf32> to vector<128xf32>
    %169 = vector.shape_cast %168 : vector<128xf32> to vector<1x128xf32>
    %170 = vector.broadcast %169 : vector<1x128xf32> to vector<32x128xf32>
    %171 = arith.mulf %166, %170 : vector<32x128xf32>
    %172 = arith.addf %165, %171 : vector<32x128xf32>
    %c7_i32 = arith.constant 7 : i32
    %173 = tpu.dynamic_rotate %74 by %c7_i32 dim 1 : vector<32x128xf32>, i32 -> vector<32x128xf32>
    %c14 = arith.constant 14 : index
    %c0_67 = arith.constant 0 : index
    %174 = vector.load %arg2[%c14, %c0_67] : memref<15x128xf32, #tpu.memory_space<vmem>>, vector<1x128xf32>
    %175 = vector.shape_cast %174 : vector<1x128xf32> to vector<128xf32>
    %176 = vector.shape_cast %175 : vector<128xf32> to vector<1x128xf32>
    %177 = vector.broadcast %176 : vector<1x128xf32> to vector<32x128xf32>
    %178 = arith.mulf %173, %177 : vector<32x128xf32>
    %179 = arith.addf %172, %178 : vector<32x128xf32>
    %cst_68 = arith.constant dense<0.000000e+00> : vector<128xf32>
    %180 = vector.multi_reduction <add>, %179, %cst_68 [0] : vector<32x128xf32> to vector<128xf32>
    %181 = vector.shape_cast %180 : vector<128xf32> to vector<1x128xf32>
    %c8_i32_69 = arith.constant 8 : i32
    %182 = tpu.dynamic_rotate %181 by %c8_i32_69 dim 1 : vector<1x128xf32>, i32 -> vector<1x128xf32>
    %183 = arith.addf %181, %182 : vector<1x128xf32>
    %c16_i32 = arith.constant 16 : i32
    %184 = tpu.dynamic_rotate %183 by %c16_i32 dim 1 : vector<1x128xf32>, i32 -> vector<1x128xf32>
    %185 = arith.addf %183, %184 : vector<1x128xf32>
    %c32_i32 = arith.constant 32 : i32
    %186 = tpu.dynamic_rotate %185 by %c32_i32 dim 1 : vector<1x128xf32>, i32 -> vector<1x128xf32>
    %187 = arith.addf %185, %186 : vector<1x128xf32>
    %c64_i32 = arith.constant 64 : i32
    %188 = tpu.dynamic_rotate %187 by %c64_i32 dim 1 : vector<1x128xf32>, i32 -> vector<1x128xf32>
    %189 = arith.addf %187, %188 : vector<1x128xf32>
    %cst_70 = arith.constant 0.001953125 : f32
    %190 = vector.broadcast %cst_70 : f32 to vector<1x128xf32>
    %191 = arith.mulf %189, %190 : vector<1x128xf32>
    %192 = vector.broadcast %191 : vector<1x128xf32> to vector<32x128xf32>
    %193 = arith.subf %179, %192 : vector<32x128xf32>
    %194 = arith.mulf %193, %193 : vector<32x128xf32>
    %cst_71 = arith.constant dense<0.000000e+00> : vector<128xf32>
    %195 = vector.multi_reduction <add>, %194, %cst_71 [0] : vector<32x128xf32> to vector<128xf32>
    %196 = vector.shape_cast %195 : vector<128xf32> to vector<1x128xf32>
    %c8_i32_72 = arith.constant 8 : i32
    %197 = tpu.dynamic_rotate %196 by %c8_i32_72 dim 1 : vector<1x128xf32>, i32 -> vector<1x128xf32>
    %198 = arith.addf %196, %197 : vector<1x128xf32>
    %c16_i32_73 = arith.constant 16 : i32
    %199 = tpu.dynamic_rotate %198 by %c16_i32_73 dim 1 : vector<1x128xf32>, i32 -> vector<1x128xf32>
    %200 = arith.addf %198, %199 : vector<1x128xf32>
    %c32_i32_74 = arith.constant 32 : i32
    %201 = tpu.dynamic_rotate %200 by %c32_i32_74 dim 1 : vector<1x128xf32>, i32 -> vector<1x128xf32>
    %202 = arith.addf %200, %201 : vector<1x128xf32>
    %c64_i32_75 = arith.constant 64 : i32
    %203 = tpu.dynamic_rotate %202 by %c64_i32_75 dim 1 : vector<1x128xf32>, i32 -> vector<1x128xf32>
    %204 = arith.addf %202, %203 : vector<1x128xf32>
    %cst_76 = arith.constant 0.001953125 : f32
    %205 = vector.broadcast %cst_76 : f32 to vector<1x128xf32>
    %206 = arith.mulf %204, %205 : vector<1x128xf32>
    %cst_77 = arith.constant 9.99999974E-6 : f32
    %207 = vector.broadcast %cst_77 : f32 to vector<1x128xf32>
    %208 = arith.addf %206, %207 : vector<1x128xf32>
    %209 = math.rsqrt %208 : vector<1x128xf32>
    %210 = vector.broadcast %209 : vector<1x128xf32> to vector<32x128xf32>
    %211 = arith.mulf %193, %210 : vector<32x128xf32>
    %cst_78 = arith.constant 0.000000e+00 : f32
    %212 = vector.broadcast %cst_78 : f32 to vector<32x128xf32>
    %213 = arith.maximumf %211, %212 : vector<32x128xf32>
    %cst_79 = arith.constant 0.000000e+00 : f32
    %214 = vector.broadcast %cst_79 : f32 to vector<2x1x128xf32>
    %c0_80 = arith.constant 0 : index
    %c0_81 = arith.constant 0 : index
    %c0_82 = arith.constant 0 : index
    %215 = vector.load %arg6[%c0_80, %c0_81, %c0_82] : memref<2x18x128xf32, #tpu.memory_space<vmem>>, vector<2x1x128xf32>
    tpu.vector_store %arg6[%c0_80, %c0_81, %c0_82], %214 {strides = array<i32>} : memref<2x18x128xf32, #tpu.memory_space<vmem>>, vector<2x1x128xf32>,
    %c0_83 = arith.constant 0 : index
    %c17_84 = arith.constant 17 : index
    %c0_85 = arith.constant 0 : index
    %216 = vector.load %arg6[%c0_83, %c17_84, %c0_85] : memref<2x18x128xf32, #tpu.memory_space<vmem>>, vector<2x1x128xf32>
    tpu.vector_store %arg6[%c0_83, %c17_84, %c0_85], %214 {strides = array<i32>} : memref<2x18x128xf32, #tpu.memory_space<vmem>>, vector<2x1x128xf32>,
    %217 = vector.shape_cast %213 : vector<32x128xf32> to vector<2x16x128xf32>
    %c0_86 = arith.constant 0 : index
    %c1_87 = arith.constant 1 : index
    %c0_88 = arith.constant 0 : index
    %218 = vector.load %arg6[%c0_86, %c1_87, %c0_88] : memref<2x18x128xf32, #tpu.memory_space<vmem>>, vector<2x16x128xf32>
    tpu.vector_store %arg6[%c0_86, %c1_87, %c0_88], %217 {strides = array<i32>} : memref<2x18x128xf32, #tpu.memory_space<vmem>>, vector<2x16x128xf32>,
    %cst_89 = arith.constant 0.000000e+00 : f32
    %219 = vector.broadcast %cst_89 : f32 to vector<32x128xf32>
    %c0_90 = arith.constant 0 : index
    %c0_91 = arith.constant 0 : index
    %c0_92 = arith.constant 0 : index
    %220 = vector.load %arg6[%c0_90, %c0_91, %c0_92] : memref<2x18x128xf32, #tpu.memory_space<vmem>>, vector<2x16x128xf32>
    %221 = vector.shape_cast %220 : vector<2x16x128xf32> to vector<32x128xf32>
    %c8_i32_93 = arith.constant 8 : i32
    %222 = tpu.dynamic_rotate %221 by %c8_i32_93 dim 1 : vector<32x128xf32>, i32 -> vector<32x128xf32>
    %c0_94 = arith.constant 0 : index
    %c0_95 = arith.constant 0 : index
    %c0_96 = arith.constant 0 : index
    %223 = vector.load %arg3[%c0_94, %c0_95, %c0_96] : memref<3x3x128xf32, #tpu.memory_space<vmem>>, vector<1x1x128xf32>
    %224 = vector.shape_cast %223 : vector<1x1x128xf32> to vector<128xf32>
    %225 = vector.shape_cast %224 : vector<128xf32> to vector<1x128xf32>
    %226 = vector.broadcast %225 : vector<1x128xf32> to vector<32x128xf32>
    %227 = arith.mulf %222, %226 : vector<32x128xf32>
    %228 = arith.addf %219, %227 : vector<32x128xf32>
    %c0_97 = arith.constant 0 : index
    %c1_98 = arith.constant 1 : index
    %c0_99 = arith.constant 0 : index
    %229 = vector.load %arg3[%c0_97, %c1_98, %c0_99] : memref<3x3x128xf32, #tpu.memory_space<vmem>>, vector<1x1x128xf32>
    %230 = vector.shape_cast %229 : vector<1x1x128xf32> to vector<128xf32>
    %231 = vector.shape_cast %230 : vector<128xf32> to vector<1x128xf32>
    %232 = vector.broadcast %231 : vector<1x128xf32> to vector<32x128xf32>
    %233 = arith.mulf %221, %232 : vector<32x128xf32>
    %234 = arith.addf %228, %233 : vector<32x128xf32>
    %c120_i32_100 = arith.constant 120 : i32
    %235 = tpu.dynamic_rotate %221 by %c120_i32_100 dim 1 : vector<32x128xf32>, i32 -> vector<32x128xf32>
    %c0_101 = arith.constant 0 : index
    %c2_102 = arith.constant 2 : index
    %c0_103 = arith.constant 0 : index
    %236 = vector.load %arg3[%c0_101, %c2_102, %c0_103] : memref<3x3x128xf32, #tpu.memory_space<vmem>>, vector<1x1x128xf32>
    %237 = vector.shape_cast %236 : vector<1x1x128xf32> to vector<128xf32>
    %238 = vector.shape_cast %237 : vector<128xf32> to vector<1x128xf32>
    %239 = vector.broadcast %238 : vector<1x128xf32> to vector<32x128xf32>
    %240 = arith.mulf %235, %239 : vector<32x128xf32>
    %241 = arith.addf %234, %240 : vector<32x128xf32>
    %c0_104 = arith.constant 0 : index
    %c1_105 = arith.constant 1 : index
    %c0_106 = arith.constant 0 : index
    %242 = vector.load %arg6[%c0_104, %c1_105, %c0_106] : memref<2x18x128xf32, #tpu.memory_space<vmem>>, vector<2x16x128xf32>
    %243 = vector.shape_cast %242 : vector<2x16x128xf32> to vector<32x128xf32>
    %c8_i32_107 = arith.constant 8 : i32
    %244 = tpu.dynamic_rotate %243 by %c8_i32_107 dim 1 : vector<32x128xf32>, i32 -> vector<32x128xf32>
    %c1_108 = arith.constant 1 : index
    %c0_109 = arith.constant 0 : index
    %c0_110 = arith.constant 0 : index
    %245 = vector.load %arg3[%c1_108, %c0_109, %c0_110] : memref<3x3x128xf32, #tpu.memory_space<vmem>>, vector<1x1x128xf32>
    %246 = vector.shape_cast %245 : vector<1x1x128xf32> to vector<128xf32>
    %247 = vector.shape_cast %246 : vector<128xf32> to vector<1x128xf32>
    %248 = vector.broadcast %247 : vector<1x128xf32> to vector<32x128xf32>
    %249 = arith.mulf %244, %248 : vector<32x128xf32>
    %250 = arith.addf %241, %249 : vector<32x128xf32>
    %c1_111 = arith.constant 1 : index
    %c1_112 = arith.constant 1 : index
    %c0_113 = arith.constant 0 : index
    %251 = vector.load %arg3[%c1_111, %c1_112, %c0_113] : memref<3x3x128xf32, #tpu.memory_space<vmem>>, vector<1x1x128xf32>
    %252 = vector.shape_cast %251 : vector<1x1x128xf32> to vector<128xf32>
    %253 = vector.shape_cast %252 : vector<128xf32> to vector<1x128xf32>
    %254 = vector.broadcast %253 : vector<1x128xf32> to vector<32x128xf32>
    %255 = arith.mulf %243, %254 : vector<32x128xf32>
    %256 = arith.addf %250, %255 : vector<32x128xf32>
    %c120_i32_114 = arith.constant 120 : i32
    %257 = tpu.dynamic_rotate %243 by %c120_i32_114 dim 1 : vector<32x128xf32>, i32 -> vector<32x128xf32>
    %c1_115 = arith.constant 1 : index
    %c2_116 = arith.constant 2 : index
    %c0_117 = arith.constant 0 : index
    %258 = vector.load %arg3[%c1_115, %c2_116, %c0_117] : memref<3x3x128xf32, #tpu.memory_space<vmem>>, vector<1x1x128xf32>
    %259 = vector.shape_cast %258 : vector<1x1x128xf32> to vector<128xf32>
    %260 = vector.shape_cast %259 : vector<128xf32> to vector<1x128xf32>
    %261 = vector.broadcast %260 : vector<1x128xf32> to vector<32x128xf32>
    %262 = arith.mulf %257, %261 : vector<32x128xf32>
    %263 = arith.addf %256, %262 : vector<32x128xf32>
    %c0_118 = arith.constant 0 : index
    %c2_119 = arith.constant 2 : index
    %c0_120 = arith.constant 0 : index
    %264 = vector.load %arg6[%c0_118, %c2_119, %c0_120] : memref<2x18x128xf32, #tpu.memory_space<vmem>>, vector<2x16x128xf32>
    %265 = vector.shape_cast %264 : vector<2x16x128xf32> to vector<32x128xf32>
    %c8_i32_121 = arith.constant 8 : i32
    %266 = tpu.dynamic_rotate %265 by %c8_i32_121 dim 1 : vector<32x128xf32>, i32 -> vector<32x128xf32>
    %c2_122 = arith.constant 2 : index
    %c0_123 = arith.constant 0 : index
    %c0_124 = arith.constant 0 : index
    %267 = vector.load %arg3[%c2_122, %c0_123, %c0_124] : memref<3x3x128xf32, #tpu.memory_space<vmem>>, vector<1x1x128xf32>
    %268 = vector.shape_cast %267 : vector<1x1x128xf32> to vector<128xf32>
    %269 = vector.shape_cast %268 : vector<128xf32> to vector<1x128xf32>
    %270 = vector.broadcast %269 : vector<1x128xf32> to vector<32x128xf32>
    %271 = arith.mulf %266, %270 : vector<32x128xf32>
    %272 = arith.addf %263, %271 : vector<32x128xf32>
    %c2_125 = arith.constant 2 : index
    %c1_126 = arith.constant 1 : index
    %c0_127 = arith.constant 0 : index
    %273 = vector.load %arg3[%c2_125, %c1_126, %c0_127] : memref<3x3x128xf32, #tpu.memory_space<vmem>>, vector<1x1x128xf32>
    %274 = vector.shape_cast %273 : vector<1x1x128xf32> to vector<128xf32>
    %275 = vector.shape_cast %274 : vector<128xf32> to vector<1x128xf32>
    %276 = vector.broadcast %275 : vector<1x128xf32> to vector<32x128xf32>
    %277 = arith.mulf %265, %276 : vector<32x128xf32>
    %278 = arith.addf %272, %277 : vector<32x128xf32>
    %c120_i32_128 = arith.constant 120 : i32
    %279 = tpu.dynamic_rotate %265 by %c120_i32_128 dim 1 : vector<32x128xf32>, i32 -> vector<32x128xf32>
    %c2_129 = arith.constant 2 : index
    %c2_130 = arith.constant 2 : index
    %c0_131 = arith.constant 0 : index
    %280 = vector.load %arg3[%c2_129, %c2_130, %c0_131] : memref<3x3x128xf32, #tpu.memory_space<vmem>>, vector<1x1x128xf32>
    %281 = vector.shape_cast %280 : vector<1x1x128xf32> to vector<128xf32>
    %282 = vector.shape_cast %281 : vector<128xf32> to vector<1x128xf32>
    %283 = vector.broadcast %282 : vector<1x128xf32> to vector<32x128xf32>
    %284 = arith.mulf %279, %283 : vector<32x128xf32>
    %285 = arith.addf %278, %284 : vector<32x128xf32>
    %cst_132 = arith.constant 0.000000e+00 : f32
    %286 = vector.broadcast %cst_132 : f32 to vector<32x128xf32>
    %c121_i32_133 = arith.constant 121 : i32
    %287 = tpu.dynamic_rotate %285 by %c121_i32_133 dim 1 : vector<32x128xf32>, i32 -> vector<32x128xf32>
    %c0_134 = arith.constant 0 : index
    %c0_135 = arith.constant 0 : index
    %288 = vector.load %arg4[%c0_134, %c0_135] : memref<15x128xf32, #tpu.memory_space<vmem>>, vector<1x128xf32>
    %289 = vector.shape_cast %288 : vector<1x128xf32> to vector<128xf32>
    %290 = vector.shape_cast %289 : vector<128xf32> to vector<1x128xf32>
    %291 = vector.broadcast %290 : vector<1x128xf32> to vector<32x128xf32>
    %292 = arith.mulf %287, %291 : vector<32x128xf32>
    %293 = arith.addf %286, %292 : vector<32x128xf32>
    %c122_i32_136 = arith.constant 122 : i32
    %294 = tpu.dynamic_rotate %285 by %c122_i32_136 dim 1 : vector<32x128xf32>, i32 -> vector<32x128xf32>
    %c1_137 = arith.constant 1 : index
    %c0_138 = arith.constant 0 : index
    %295 = vector.load %arg4[%c1_137, %c0_138] : memref<15x128xf32, #tpu.memory_space<vmem>>, vector<1x128xf32>
    %296 = vector.shape_cast %295 : vector<1x128xf32> to vector<128xf32>
    %297 = vector.shape_cast %296 : vector<128xf32> to vector<1x128xf32>
    %298 = vector.broadcast %297 : vector<1x128xf32> to vector<32x128xf32>
    %299 = arith.mulf %294, %298 : vector<32x128xf32>
    %300 = arith.addf %293, %299 : vector<32x128xf32>
    %c123_i32_139 = arith.constant 123 : i32
    %301 = tpu.dynamic_rotate %285 by %c123_i32_139 dim 1 : vector<32x128xf32>, i32 -> vector<32x128xf32>
    %c2_140 = arith.constant 2 : index
    %c0_141 = arith.constant 0 : index
    %302 = vector.load %arg4[%c2_140, %c0_141] : memref<15x128xf32, #tpu.memory_space<vmem>>, vector<1x128xf32>
    %303 = vector.shape_cast %302 : vector<1x128xf32> to vector<128xf32>
    %304 = vector.shape_cast %303 : vector<128xf32> to vector<1x128xf32>
    %305 = vector.broadcast %304 : vector<1x128xf32> to vector<32x128xf32>
    %306 = arith.mulf %301, %305 : vector<32x128xf32>
    %307 = arith.addf %300, %306 : vector<32x128xf32>
    %c124_i32_142 = arith.constant 124 : i32
    %308 = tpu.dynamic_rotate %285 by %c124_i32_142 dim 1 : vector<32x128xf32>, i32 -> vector<32x128xf32>
    %c3_143 = arith.constant 3 : index
    %c0_144 = arith.constant 0 : index
    %309 = vector.load %arg4[%c3_143, %c0_144] : memref<15x128xf32, #tpu.memory_space<vmem>>, vector<1x128xf32>
    %310 = vector.shape_cast %309 : vector<1x128xf32> to vector<128xf32>
    %311 = vector.shape_cast %310 : vector<128xf32> to vector<1x128xf32>
    %312 = vector.broadcast %311 : vector<1x128xf32> to vector<32x128xf32>
    %313 = arith.mulf %308, %312 : vector<32x128xf32>
    %314 = arith.addf %307, %313 : vector<32x128xf32>
    %c125_i32_145 = arith.constant 125 : i32
    %315 = tpu.dynamic_rotate %285 by %c125_i32_145 dim 1 : vector<32x128xf32>, i32 -> vector<32x128xf32>
    %c4_146 = arith.constant 4 : index
    %c0_147 = arith.constant 0 : index
    %316 = vector.load %arg4[%c4_146, %c0_147] : memref<15x128xf32, #tpu.memory_space<vmem>>, vector<1x128xf32>
    %317 = vector.shape_cast %316 : vector<1x128xf32> to vector<128xf32>
    %318 = vector.shape_cast %317 : vector<128xf32> to vector<1x128xf32>
    %319 = vector.broadcast %318 : vector<1x128xf32> to vector<32x128xf32>
    %320 = arith.mulf %315, %319 : vector<32x128xf32>
    %321 = arith.addf %314, %320 : vector<32x128xf32>
    %c126_i32_148 = arith.constant 126 : i32
    %322 = tpu.dynamic_rotate %285 by %c126_i32_148 dim 1 : vector<32x128xf32>, i32 -> vector<32x128xf32>
    %c5_149 = arith.constant 5 : index
    %c0_150 = arith.constant 0 : index
    %323 = vector.load %arg4[%c5_149, %c0_150] : memref<15x128xf32, #tpu.memory_space<vmem>>, vector<1x128xf32>
    %324 = vector.shape_cast %323 : vector<1x128xf32> to vector<128xf32>
    %325 = vector.shape_cast %324 : vector<128xf32> to vector<1x128xf32>
    %326 = vector.broadcast %325 : vector<1x128xf32> to vector<32x128xf32>
    %327 = arith.mulf %322, %326 : vector<32x128xf32>
    %328 = arith.addf %321, %327 : vector<32x128xf32>
    %c127_i32_151 = arith.constant 127 : i32
    %329 = tpu.dynamic_rotate %285 by %c127_i32_151 dim 1 : vector<32x128xf32>, i32 -> vector<32x128xf32>
    %c6_152 = arith.constant 6 : index
    %c0_153 = arith.constant 0 : index
    %330 = vector.load %arg4[%c6_152, %c0_153] : memref<15x128xf32, #tpu.memory_space<vmem>>, vector<1x128xf32>
    %331 = vector.shape_cast %330 : vector<1x128xf32> to vector<128xf32>
    %332 = vector.shape_cast %331 : vector<128xf32> to vector<1x128xf32>
    %333 = vector.broadcast %332 : vector<1x128xf32> to vector<32x128xf32>
    %334 = arith.mulf %329, %333 : vector<32x128xf32>
    %335 = arith.addf %328, %334 : vector<32x128xf32>
    %c7_154 = arith.constant 7 : index
    %c0_155 = arith.constant 0 : index
    %336 = vector.load %arg4[%c7_154, %c0_155] : memref<15x128xf32, #tpu.memory_space<vmem>>, vector<1x128xf32>
    %337 = vector.shape_cast %336 : vector<1x128xf32> to vector<128xf32>
    %338 = vector.shape_cast %337 : vector<128xf32> to vector<1x128xf32>
    %339 = vector.broadcast %338 : vector<1x128xf32> to vector<32x128xf32>
    %340 = arith.mulf %285, %339 : vector<32x128xf32>
    %341 = arith.addf %335, %340 : vector<32x128xf32>
    %c1_i32_156 = arith.constant 1 : i32
    %342 = tpu.dynamic_rotate %285 by %c1_i32_156 dim 1 : vector<32x128xf32>, i32 -> vector<32x128xf32>
    %c8_157 = arith.constant 8 : index
    %c0_158 = arith.constant 0 : index
    %343 = vector.load %arg4[%c8_157, %c0_158] : memref<15x128xf32, #tpu.memory_space<vmem>>, vector<1x128xf32>
    %344 = vector.shape_cast %343 : vector<1x128xf32> to vector<128xf32>
    %345 = vector.shape_cast %344 : vector<128xf32> to vector<1x128xf32>
    %346 = vector.broadcast %345 : vector<1x128xf32> to vector<32x128xf32>
    %347 = arith.mulf %342, %346 : vector<32x128xf32>
    %348 = arith.addf %341, %347 : vector<32x128xf32>
    %c2_i32_159 = arith.constant 2 : i32
    %349 = tpu.dynamic_rotate %285 by %c2_i32_159 dim 1 : vector<32x128xf32>, i32 -> vector<32x128xf32>
    %c9_160 = arith.constant 9 : index
    %c0_161 = arith.constant 0 : index
    %350 = vector.load %arg4[%c9_160, %c0_161] : memref<15x128xf32, #tpu.memory_space<vmem>>, vector<1x128xf32>
    %351 = vector.shape_cast %350 : vector<1x128xf32> to vector<128xf32>
    %352 = vector.shape_cast %351 : vector<128xf32> to vector<1x128xf32>
    %353 = vector.broadcast %352 : vector<1x128xf32> to vector<32x128xf32>
    %354 = arith.mulf %349, %353 : vector<32x128xf32>
    %355 = arith.addf %348, %354 : vector<32x128xf32>
    %c3_i32_162 = arith.constant 3 : i32
    %356 = tpu.dynamic_rotate %285 by %c3_i32_162 dim 1 : vector<32x128xf32>, i32 -> vector<32x128xf32>
    %c10_163 = arith.constant 10 : index
    %c0_164 = arith.constant 0 : index
    %357 = vector.load %arg4[%c10_163, %c0_164] : memref<15x128xf32, #tpu.memory_space<vmem>>, vector<1x128xf32>
    %358 = vector.shape_cast %357 : vector<1x128xf32> to vector<128xf32>
    %359 = vector.shape_cast %358 : vector<128xf32> to vector<1x128xf32>
    %360 = vector.broadcast %359 : vector<1x128xf32> to vector<32x128xf32>
    %361 = arith.mulf %356, %360 : vector<32x128xf32>
    %362 = arith.addf %355, %361 : vector<32x128xf32>
    %c4_i32_165 = arith.constant 4 : i32
    %363 = tpu.dynamic_rotate %285 by %c4_i32_165 dim 1 : vector<32x128xf32>, i32 -> vector<32x128xf32>
    %c11_166 = arith.constant 11 : index
    %c0_167 = arith.constant 0 : index
    %364 = vector.load %arg4[%c11_166, %c0_167] : memref<15x128xf32, #tpu.memory_space<vmem>>, vector<1x128xf32>
    %365 = vector.shape_cast %364 : vector<1x128xf32> to vector<128xf32>
    %366 = vector.shape_cast %365 : vector<128xf32> to vector<1x128xf32>
    %367 = vector.broadcast %366 : vector<1x128xf32> to vector<32x128xf32>
    %368 = arith.mulf %363, %367 : vector<32x128xf32>
    %369 = arith.addf %362, %368 : vector<32x128xf32>
    %c5_i32_168 = arith.constant 5 : i32
    %370 = tpu.dynamic_rotate %285 by %c5_i32_168 dim 1 : vector<32x128xf32>, i32 -> vector<32x128xf32>
    %c12_169 = arith.constant 12 : index
    %c0_170 = arith.constant 0 : index
    %371 = vector.load %arg4[%c12_169, %c0_170] : memref<15x128xf32, #tpu.memory_space<vmem>>, vector<1x128xf32>
    %372 = vector.shape_cast %371 : vector<1x128xf32> to vector<128xf32>
    %373 = vector.shape_cast %372 : vector<128xf32> to vector<1x128xf32>
    %374 = vector.broadcast %373 : vector<1x128xf32> to vector<32x128xf32>
    %375 = arith.mulf %370, %374 : vector<32x128xf32>
    %376 = arith.addf %369, %375 : vector<32x128xf32>
    %c6_i32_171 = arith.constant 6 : i32
    %377 = tpu.dynamic_rotate %285 by %c6_i32_171 dim 1 : vector<32x128xf32>, i32 -> vector<32x128xf32>
    %c13_172 = arith.constant 13 : index
    %c0_173 = arith.constant 0 : index
    %378 = vector.load %arg4[%c13_172, %c0_173] : memref<15x128xf32, #tpu.memory_space<vmem>>, vector<1x128xf32>
    %379 = vector.shape_cast %378 : vector<1x128xf32> to vector<128xf32>
    %380 = vector.shape_cast %379 : vector<128xf32> to vector<1x128xf32>
    %381 = vector.broadcast %380 : vector<1x128xf32> to vector<32x128xf32>
    %382 = arith.mulf %377, %381 : vector<32x128xf32>
    %383 = arith.addf %376, %382 : vector<32x128xf32>
    %c7_i32_174 = arith.constant 7 : i32
    %384 = tpu.dynamic_rotate %285 by %c7_i32_174 dim 1 : vector<32x128xf32>, i32 -> vector<32x128xf32>
    %c14_175 = arith.constant 14 : index
    %c0_176 = arith.constant 0 : index
    %385 = vector.load %arg4[%c14_175, %c0_176] : memref<15x128xf32, #tpu.memory_space<vmem>>, vector<1x128xf32>
    %386 = vector.shape_cast %385 : vector<1x128xf32> to vector<128xf32>
    %387 = vector.shape_cast %386 : vector<128xf32> to vector<1x128xf32>
    %388 = vector.broadcast %387 : vector<1x128xf32> to vector<32x128xf32>
    %389 = arith.mulf %384, %388 : vector<32x128xf32>
    %390 = arith.addf %383, %389 : vector<32x128xf32>
    %cst_177 = arith.constant dense<0.000000e+00> : vector<128xf32>
    %391 = vector.multi_reduction <add>, %390, %cst_177 [0] : vector<32x128xf32> to vector<128xf32>
    %392 = vector.shape_cast %391 : vector<128xf32> to vector<1x128xf32>
    %c8_i32_178 = arith.constant 8 : i32
    %393 = tpu.dynamic_rotate %392 by %c8_i32_178 dim 1 : vector<1x128xf32>, i32 -> vector<1x128xf32>
    %394 = arith.addf %392, %393 : vector<1x128xf32>
    %c16_i32_179 = arith.constant 16 : i32
    %395 = tpu.dynamic_rotate %394 by %c16_i32_179 dim 1 : vector<1x128xf32>, i32 -> vector<1x128xf32>
    %396 = arith.addf %394, %395 : vector<1x128xf32>
    %c32_i32_180 = arith.constant 32 : i32
    %397 = tpu.dynamic_rotate %396 by %c32_i32_180 dim 1 : vector<1x128xf32>, i32 -> vector<1x128xf32>
    %398 = arith.addf %396, %397 : vector<1x128xf32>
    %c64_i32_181 = arith.constant 64 : i32
    %399 = tpu.dynamic_rotate %398 by %c64_i32_181 dim 1 : vector<1x128xf32>, i32 -> vector<1x128xf32>
    %400 = arith.addf %398, %399 : vector<1x128xf32>
    %cst_182 = arith.constant 0.001953125 : f32
    %401 = vector.broadcast %cst_182 : f32 to vector<1x128xf32>
    %402 = arith.mulf %400, %401 : vector<1x128xf32>
    %403 = vector.broadcast %402 : vector<1x128xf32> to vector<32x128xf32>
    %404 = arith.subf %390, %403 : vector<32x128xf32>
    %405 = arith.mulf %404, %404 : vector<32x128xf32>
    %cst_183 = arith.constant dense<0.000000e+00> : vector<128xf32>
    %406 = vector.multi_reduction <add>, %405, %cst_183 [0] : vector<32x128xf32> to vector<128xf32>
    %407 = vector.shape_cast %406 : vector<128xf32> to vector<1x128xf32>
    %c8_i32_184 = arith.constant 8 : i32
    %408 = tpu.dynamic_rotate %407 by %c8_i32_184 dim 1 : vector<1x128xf32>, i32 -> vector<1x128xf32>
    %409 = arith.addf %407, %408 : vector<1x128xf32>
    %c16_i32_185 = arith.constant 16 : i32
    %410 = tpu.dynamic_rotate %409 by %c16_i32_185 dim 1 : vector<1x128xf32>, i32 -> vector<1x128xf32>
    %411 = arith.addf %409, %410 : vector<1x128xf32>
    %c32_i32_186 = arith.constant 32 : i32
    %412 = tpu.dynamic_rotate %411 by %c32_i32_186 dim 1 : vector<1x128xf32>, i32 -> vector<1x128xf32>
    %413 = arith.addf %411, %412 : vector<1x128xf32>
    %c64_i32_187 = arith.constant 64 : i32
    %414 = tpu.dynamic_rotate %413 by %c64_i32_187 dim 1 : vector<1x128xf32>, i32 -> vector<1x128xf32>
    %415 = arith.addf %413, %414 : vector<1x128xf32>
    %cst_188 = arith.constant 0.001953125 : f32
    %416 = vector.broadcast %cst_188 : f32 to vector<1x128xf32>
    %417 = arith.mulf %415, %416 : vector<1x128xf32>
    %cst_189 = arith.constant 9.99999974E-6 : f32
    %418 = vector.broadcast %cst_189 : f32 to vector<1x128xf32>
    %419 = arith.addf %417, %418 : vector<1x128xf32>
    %420 = math.rsqrt %419 : vector<1x128xf32>
    %421 = vector.broadcast %420 : vector<1x128xf32> to vector<32x128xf32>
    %422 = arith.mulf %404, %421 : vector<32x128xf32>
    %c0_190 = arith.constant 0 : index
    %c0_191 = arith.constant 0 : index
    %423 = vector.load %arg5[%c0_190, %c0_191] : memref<32x128xf32, #tpu.memory_space<vmem>>, vector<32x128xf32>
    tpu.vector_store %arg5[%c0_190, %c0_191], %422 {strides = array<i32>} : memref<32x128xf32, #tpu.memory_space<vmem>>, vector<32x128xf32>,
    return
  }
}

</mosaic_0001>

<llo_original>
// kernel: tile.21
$region0: #{tile.21}
  %s0 = inlined_call_operand.vmem [shape: f32[3,3,16,8], index: 0, kind: input, shape index: {}]
  %s1 = inlined_call_operand.vmem [shape: f32[3,3,128], index: 1, kind: output, shape index: {}]
  $region1: #{tile.21} parent=0
    #allocation0 [shape = 'u8[12288]{0}', space=vmem, size = 0x3000, scoped, tag = 'scoped mem for output reshape']
    %s2 = smov 3
    %v3 = vld [vmem:[%s0] ss:$16 sm:%s2]
    %s4 = smov 12
    %v5 = vld [vmem:[%s0] ss:$16 sm:%s4]
    %vm6 = vcmask 1043458
    %v7 = vsel %vm6, %v5, %v3
    %s8 = smov 48
    %v9 = vld [vmem:[%s0] ss:$16 sm:%s8]
    %vm10 = vcmask 1045508
    %v11 = vsel %vm10, %v9, %v7
    %s12 = smov 192
    %v13 = vld [vmem:[%s0] ss:$16 sm:%s12]
    %vm14 = vcmask 1047558
    %v15 = vsel %vm14, %v13, %v11
    %vm16 = vcmask 64512
    %17 = vst.msk [vmem:[#allocation0] sm:$0x7] %vm16, %v15
    %s18 = scalar_lea.vmem [#allocation0], 5
    %19 = vst.msk [vmem:[%s18] sm:$0x38] %vm16, %v15
    %s20 = scalar_lea.vmem [#allocation0], 10
    %21 = vst.msk [vmem:[%s20] sm:$0xc0] %vm16, %v15
    %s22 = scalar_lea.vmem %s0, 128
    %v23 = vld [vmem:[%s22] sm:$0x1]
    %vm24 = vcmask 64512
    %s25 = scalar_lea.vmem [#allocation0], 18
    %26 = vst.msk [vmem:[%s25] sm:$0x1] %vm24, %v23
    %s27 = scalar_lea.vmem %s0, 15
    %s28 = smov 3
    %v29 = vld [vmem:[%s27] ss:$16 sm:%s28]
    %s30 = scalar_lea.vmem %s0, 15
    %s31 = smov 12
    %v32 = vld [vmem:[%s30] ss:$16 sm:%s31]
    %vm33 = vcmask 1043458
    %v34 = vsel %vm33, %v32, %v29
    %s35 = scalar_lea.vmem %s0, 15
    %s36 = smov 48
    %v37 = vld [vmem:[%s35] ss:$16 sm:%s36]
    %vm38 = vcmask 1045508
    %v39 = vsel %vm38, %v37, %v34
    %s40 = scalar_lea.vmem %s0, 15
    %s41 = smov 192
    %v42 = vld [vmem:[%s40] ss:$16 sm:%s41]
    %vm43 = vcmask 1047558
    %v44 = vsel %vm43, %v42, %v39
    %45 = vrot.lane.b32.xlu0 %v44, 120
    %v46 = vpop.permute.xlu0 %45
    %vm47 = vcmask 1048512
    %48 = vst.msk [vmem:[#allocation0] sm:$0x7] %vm47, %v46
    %s49 = scalar_lea.vmem [#allocation0], 5
    %50 = vst.msk [vmem:[%s49] sm:$0x38] %vm47, %v46
    %s51 = scalar_lea.vmem [#allocation0], 10
    %52 = vst.msk [vmem:[%s51] sm:$0xc0] %vm47, %v46
    %s53 = scalar_lea.vmem %s0, 143
    %v54 = vld [vmem:[%s53] sm:$0x1]
    %55 = vrot.lane.b32.xlu0 %v54, 120
    %v56 = vpop.permute.xlu0 %55
    %vm57 = vcmask 1048512
    %s58 = scalar_lea.vmem [#allocation0], 18
    %59 = vst.msk [vmem:[%s58] sm:$0x1] %vm57, %v56
    %s60 = scalar_lea.vmem %s0, 14
    %s61 = smov 3
    %v62 = vld [vmem:[%s60] ss:$16 sm:%s61]
    %s63 = scalar_lea.vmem %s0, 14
    %s64 = smov 12
    %v65 = vld [vmem:[%s63] ss:$16 sm:%s64]
    %vm66 = vcmask 1043458
    %v67 = vsel %vm66, %v65, %v62
    %s68 = scalar_lea.vmem %s0, 14
    %s69 = smov 48
    %v70 = vld [vmem:[%s68] ss:$16 sm:%s69]
    %vm71 = vcmask 1045508
    %v72 = vsel %vm71, %v70, %v67
    %s73 = scalar_lea.vmem %s0, 14
    %s74 = smov 192
    %v75 = vld [vmem:[%s73] ss:$16 sm:%s74]
    %vm76 = vcmask 1047558
    %v77 = vsel %vm76, %v75, %v72
    %78 = vrot.lane.b32.xlu0 %v77, 112
    %v79 = vpop.permute.xlu0 %78
    %vm80 = vcmask 982912
    %81 = vst.msk [vmem:[#allocation0] sm:$0x7] %vm80, %v79
    %s82 = scalar_lea.vmem [#allocation0], 5
    %83 = vst.msk [vmem:[%s82] sm:$0x38] %vm80, %v79
    %s84 = scalar_lea.vmem [#allocation0], 10
    %85 = vst.msk [vmem:[%s84] sm:$0xc0] %vm80, %v79
    %s86 = scalar_lea.vmem %s0, 142
    %v87 = vld [vmem:[%s86] sm:$0x1]
    %88 = vrot.lane.b32.xlu0 %v87, 112
    %v89 = vpop.permute.xlu0 %88
    %vm90 = vcmask 982912
    %s91 = scalar_lea.vmem [#allocation0], 18
    %92 = vst.msk [vmem:[%s91] sm:$0x1] %vm90, %v89
    %s93 = scalar_lea.vmem %s0, 13
    %s94 = smov 3
    %v95 = vld [vmem:[%s93] ss:$16 sm:%s94]
    %s96 = scalar_lea.vmem %s0, 13
    %s97 = smov 12
    %v98 = vld [vmem:[%s96] ss:$16 sm:%s97]
    %vm99 = vcmask 1043458
    %v100 = vsel %vm99, %v98, %v95
    %s101 = scalar_lea.vmem %s0, 13
    %s102 = smov 48
    %v103 = vld [vmem:[%s101] ss:$16 sm:%s102]
    %vm104 = vcmask 1045508
    %v105 = vsel %vm104, %v103, %v100
    %s106 = scalar_lea.vmem %s0, 13
    %s107 = smov 192
    %v108 = vld [vmem:[%s106] ss:$16 sm:%s107]
    %vm109 = vcmask 1047558
    %v110 = vsel %vm109, %v108, %v105
    %111 = vrot.lane.b32.xlu0 %v110, 104
    %v112 = vpop.permute.xlu0 %111
    %vm113 = vcmask 917312
    %114 = vst.msk [vmem:[#allocation0] sm:$0x7] %vm113, %v112
    %s115 = scalar_lea.vmem [#allocation0], 5
    %116 = vst.msk [vmem:[%s115] sm:$0x38] %vm113, %v112
    %s117 = scalar_lea.vmem [#allocation0], 10
    %118 = vst.msk [vmem:[%s117] sm:$0xc0] %vm113, %v112
    %s119 = scalar_lea.vmem %s0, 141
    %v120 = vld [vmem:[%s119] sm:$0x1]
    %121 = vrot.lane.b32.xlu0 %v120, 104
    %v122 = vpop.permute.xlu0 %121
    %vm123 = vcmask 917312
    %s124 = scalar_lea.vmem [#allocation0], 18
    %125 = vst.msk [vmem:[%s124] sm:$0x1] %vm123, %v122
    %s126 = scalar_lea.vmem %s0, 12
    %s127 = smov 3
    %v128 = vld [vmem:[%s126] ss:$16 sm:%s127]
    %s129 = scalar_lea.vmem %s0, 12
    %s130 = smov 12
    %v131 = vld [vmem:[%s129] ss:$16 sm:%s130]
    %vm132 = vcmask 1043458
    %v133 = vsel %vm132, %v131, %v128
    %s134 = scalar_lea.vmem %s0, 12
    %s135 = smov 48
    %v136 = vld [vmem:[%s134] ss:$16 sm:%s135]
    %vm137 = vcmask 1045508
    %v138 = vsel %vm137, %v136, %v133
    %s139 = scalar_lea.vmem %s0, 12
    %s140 = smov 192
    %v141 = vld [vmem:[%s139] ss:$16 sm:%s140]
    %vm142 = vcmask 1047558
    %v143 = vsel %vm142, %v141, %v138
    %144 = vrot.lane.b32.xlu0 %v143, 96
    %v145 = vpop.permute.xlu0 %144
    %vm146 = vcmask 851712
    %147 = vst.msk [vmem:[#allocation0] sm:$0x7] %vm146, %v145
    %s148 = scalar_lea.vmem [#allocation0], 5
    %149 = vst.msk [vmem:[%s148] sm:$0x38] %vm146, %v145
    %s150 = scalar_lea.vmem [#allocation0], 10
    %151 = vst.msk [vmem:[%s150] sm:$0xc0] %vm146, %v145
    %s152 = scalar_lea.vmem %s0, 140
    %v153 = vld [vmem:[%s152] sm:$0x1]
    %154 = vrot.lane.b32.xlu0 %v153, 96
    %v155 = vpop.permute.xlu0 %154
    %vm156 = vcmask 851712
    %s157 = scalar_lea.vmem [#allocation0], 18
    %158 = vst.msk [vmem:[%s157] sm:$0x1] %vm156, %v155
    %s159 = scalar_lea.vmem %s0, 11
    %s160 = smov 3
    %v161 = vld [vmem:[%s159] ss:$16 sm:%s160]
    %s162 = scalar_lea.vmem %s0, 11
    %s163 = smov 12
    %v164 = vld [vmem:[%s162] ss:$16 sm:%s163]
    %vm165 = vcmask 1043458
    %v166 = vsel %vm165, %v164, %v161
    %s167 = scalar_lea.vmem %s0, 11
    %s168 = smov 48
    %v169 = vld [vmem:[%s167] ss:$16 sm:%s168]
    %vm170 = vcmask 1045508
    %v171 = vsel %vm170, %v169, %v166
    %s172 = scalar_lea.vmem %s0, 11
    %s173 = smov 192
    %v174 = vld [vmem:[%s172] ss:$16 sm:%s173]
    %vm175 = vcmask 1047558
    %v176 = vsel %vm175, %v174, %v171
    %177 = vrot.lane.b32.xlu0 %v176, 88
    %v178 = vpop.permute.xlu0 %177
    %vm179 = vcmask 786112
    %180 = vst.msk [vmem:[#allocation0] sm:$0x7] %vm179, %v178
    %s181 = scalar_lea.vmem [#allocation0], 5
    %182 = vst.msk [vmem:[%s181] sm:$0x38] %vm179, %v178
    %s183 = scalar_lea.vmem [#allocation0], 10
    %184 = vst.msk [vmem:[%s183] sm:$0xc0] %vm179, %v178
    %s185 = scalar_lea.vmem %s0, 139
    %v186 = vld [vmem:[%s185] sm:$0x1]
    %187 = vrot.lane.b32.xlu0 %v186, 88
    %v188 = vpop.permute.xlu0 %187
    %vm189 = vcmask 786112
    %s190 = scalar_lea.vmem [#allocation0], 18
    %191 = vst.msk [vmem:[%s190] sm:$0x1] %vm189, %v188
    %s192 = scalar_lea.vmem %s0, 10
    %s193 = smov 3
    %v194 = vld [vmem:[%s192] ss:$16 sm:%s193]
    %s195 = scalar_lea.vmem %s0, 10
    %s196 = smov 12
    %v197 = vld [vmem:[%s195] ss:$16 sm:%s196]
    %vm198 = vcmask 1043458
    %v199 = vsel %vm198, %v197, %v194
    %s200 = scalar_lea.vmem %s0, 10
    %s201 = smov 48
    %v202 = vld [vmem:[%s200] ss:$16 sm:%s201]
    %vm203 = vcmask 1045508
    %v204 = vsel %vm203, %v202, %v199
    %s205 = scalar_lea.vmem %s0, 10
    %s206 = smov 192
    %v207 = vld [vmem:[%s205] ss:$16 sm:%s206]
    %vm208 = vcmask 1047558
    %v209 = vsel %vm208, %v207, %v204
    %210 = vrot.lane.b32.xlu0 %v209, 80
    %v211 = vpop.permute.xlu0 %210
    %vm212 = vcmask 720512
    %213 = vst.msk [vmem:[#allocation0] sm:$0x7] %vm212, %v211
    %s214 = scalar_lea.vmem [#allocation0], 5
    %215 = vst.msk [vmem:[%s214] sm:$0x38] %vm212, %v211
    %s216 = scalar_lea.vmem [#allocation0], 10
    %217 = vst.msk [vmem:[%s216] sm:$0xc0] %vm212, %v211
    %s218 = scalar_lea.vmem %s0, 138
    %v219 = vld [vmem:[%s218] sm:$0x1]
    %220 = vrot.lane.b32.xlu0 %v219, 80
    %v221 = vpop.permute.xlu0 %220
    %vm222 = vcmask 720512
    %s223 = scalar_lea.vmem [#allocation0], 18
    %224 = vst.msk [vmem:[%s223] sm:$0x1] %vm222, %v221
    %s225 = scalar_lea.vmem %s0, 9
    %s226 = smov 3
    %v227 = vld [vmem:[%s225] ss:$16 sm:%s226]
    %s228 = scalar_lea.vmem %s0, 9
    %s229 = smov 12
    %v230 = vld [vmem:[%s228] ss:$16 sm:%s229]
    %vm231 = vcmask 1043458
    %v232 = vsel %vm231, %v230, %v227
    %s233 = scalar_lea.vmem %s0, 9
    %s234 = smov 48
    %v235 = vld [vmem:[%s233] ss:$16 sm:%s234]
    %vm236 = vcmask 1045508
    %v237 = vsel %vm236, %v235, %v232
    %s238 = scalar_lea.vmem %s0, 9
    %s239 = smov 192
    %v240 = vld [vmem:[%s238] ss:$16 sm:%s239]
    %vm241 = vcmask 1047558
    %v242 = vsel %vm241, %v240, %v237
    %243 = vrot.lane.b32.xlu0 %v242, 72
    %v244 = vpop.permute.xlu0 %243
    %vm245 = vcmask 654912
    %246 = vst.msk [vmem:[#allocation0] sm:$0x7] %vm245, %v244
    %s247 = scalar_lea.vmem [#allocation0], 5
    %248 = vst.msk [vmem:[%s247] sm:$0x38] %vm245, %v244
    %s249 = scalar_lea.vmem [#allocation0], 10
    %250 = vst.msk [vmem:[%s249] sm:$0xc0] %vm245, %v244
    %s251 = scalar_lea.vmem %s0, 137
    %v252 = vld [vmem:[%s251] sm:$0x1]
    %253 = vrot.lane.b32.xlu0 %v252, 72
    %v254 = vpop.permute.xlu0 %253
    %vm255 = vcmask 654912
    %s256 = scalar_lea.vmem [#allocation0], 18
    %257 = vst.msk [vmem:[%s256] sm:$0x1] %vm255, %v254
    %s258 = scalar_lea.vmem %s0, 8
    %s259 = smov 3
    %v260 = vld [vmem:[%s258] ss:$16 sm:%s259]
    %s261 = scalar_lea.vmem %s0, 8
    %s262 = smov 12
    %v263 = vld [vmem:[%s261] ss:$16 sm:%s262]
    %vm264 = vcmask 1043458
    %v265 = vsel %vm264, %v263, %v260
    %s266 = scalar_lea.vmem %s0, 8
    %s267 = smov 48
    %v268 = vld [vmem:[%s266] ss:$16 sm:%s267]
    %vm269 = vcmask 1045508
    %v270 = vsel %vm269, %v268, %v265
    %s271 = scalar_lea.vmem %s0, 8
    %s272 = smov 192
    %v273 = vld [vmem:[%s271] ss:$16 sm:%s272]
    %vm274 = vcmask 1047558
    %v275 = vsel %vm274, %v273, %v270
    %276 = vrot.lane.b32.xlu0 %v275, 64
    %v277 = vpop.permute.xlu0 %276
    %vm278 = vcmask 589312
    %279 = vst.msk [vmem:[#allocation0] sm:$0x7] %vm278, %v277
    %s280 = scalar_lea.vmem [#allocation0], 5
    %281 = vst.msk [vmem:[%s280] sm:$0x38] %vm278, %v277
    %s282 = scalar_lea.vmem [#allocation0], 10
    %283 = vst.msk [vmem:[%s282] sm:$0xc0] %vm278, %v277
    %s284 = scalar_lea.vmem %s0, 136
    %v285 = vld [vmem:[%s284] sm:$0x1]
    %286 = vrot.lane.b32.xlu0 %v285, 64
    %v287 = vpop.permute.xlu0 %286
    %vm288 = vcmask 589312
    %s289 = scalar_lea.vmem [#allocation0], 18
    %290 = vst.msk [vmem:[%s289] sm:$0x1] %vm288, %v287
    %s291 = scalar_lea.vmem %s0, 7
    %s292 = smov 3
    %v293 = vld [vmem:[%s291] ss:$16 sm:%s292]
    %s294 = scalar_lea.vmem %s0, 7
    %s295 = smov 12
    %v296 = vld [vmem:[%s294] ss:$16 sm:%s295]
    %vm297 = vcmask 1043458
    %v298 = vsel %vm297, %v296, %v293
    %s299 = scalar_lea.vmem %s0, 7
    %s300 = smov 48
    %v301 = vld [vmem:[%s299] ss:$16 sm:%s300]
    %vm302 = vcmask 1045508
    %v303 = vsel %vm302, %v301, %v298
    %s304 = scalar_lea.vmem %s0, 7
    %s305 = smov 192
    %v306 = vld [vmem:[%s304] ss:$16 sm:%s305]
    %vm307 = vcmask 1047558
    %v308 = vsel %vm307, %v306, %v303
    %309 = vrot.lane.b32.xlu0 %v308, 56
    %v310 = vpop.permute.xlu0 %309
    %vm311 = vcmask 523712
    %312 = vst.msk [vmem:[#allocation0] sm:$0x7] %vm311, %v310
    %s313 = scalar_lea.vmem [#allocation0], 5
    %314 = vst.msk [vmem:[%s313] sm:$0x38] %vm311, %v310
    %s315 = scalar_lea.vmem [#allocation0], 10
    %316 = vst.msk [vmem:[%s315] sm:$0xc0] %vm311, %v310
    %s317 = scalar_lea.vmem %s0, 135
    %v318 = vld [vmem:[%s317] sm:$0x1]
    %319 = vrot.lane.b32.xlu0 %v318, 56
    %v320 = vpop.permute.xlu0 %319
    %vm321 = vcmask 523712
    %s322 = scalar_lea.vmem [#allocation0], 18
    %323 = vst.msk [vmem:[%s322] sm:$0x1] %vm321, %v320
    %s324 = scalar_lea.vmem %s0, 6
    %s325 = smov 3
    %v326 = vld [vmem:[%s324] ss:$16 sm:%s325]
    %s327 = scalar_lea.vmem %s0, 6
    %s328 = smov 12
    %v329 = vld [vmem:[%s327] ss:$16 sm:%s328]
    %vm330 = vcmask 1043458
    %v331 = vsel %vm330, %v329, %v326
    %s332 = scalar_lea.vmem %s0, 6
    %s333 = smov 48
    %v334 = vld [vmem:[%s332] ss:$16 sm:%s333]
    %vm335 = vcmask 1045508
    %v336 = vsel %vm335, %v334, %v331
    %s337 = scalar_lea.vmem %s0, 6
    %s338 = smov 192
    %v339 = vld [vmem:[%s337] ss:$16 sm:%s338]
    %vm340 = vcmask 1047558
    %v341 = vsel %vm340, %v339, %v336
    %342 = vrot.lane.b32.xlu0 %v341, 48
    %v343 = vpop.permute.xlu0 %342
    %vm344 = vcmask 458112
    %345 = vst.msk [vmem:[#allocation0] sm:$0x7] %vm344, %v343
    %s346 = scalar_lea.vmem [#allocation0], 5
    %347 = vst.msk [vmem:[%s346] sm:$0x38] %vm344, %v343
    %s348 = scalar_lea.vmem [#allocation0], 10
    %349 = vst.msk [vmem:[%s348] sm:$0xc0] %vm344, %v343
    %s350 = scalar_lea.vmem %s0, 134
    %v351 = vld [vmem:[%s350] sm:$0x1]
    %352 = vrot.lane.b32.xlu0 %v351, 48
    %v353 = vpop.permute.xlu0 %352
    %vm354 = vcmask 458112
    %s355 = scalar_lea.vmem [#allocation0], 18
    %356 = vst.msk [vmem:[%s355] sm:$0x1] %vm354, %v353
    %s357 = scalar_lea.vmem %s0, 5
    %s358 = smov 3
    %v359 = vld [vmem:[%s357] ss:$16 sm:%s358]
    %s360 = scalar_lea.vmem %s0, 5
    %s361 = smov 12
    %v362 = vld [vmem:[%s360] ss:$16 sm:%s361]
    %vm363 = vcmask 1043458
    %v364 = vsel %vm363, %v362, %v359
    %s365 = scalar_lea.vmem %s0, 5
    %s366 = smov 48
    %v367 = vld [vmem:[%s365] ss:$16 sm:%s366]
    %vm368 = vcmask 1045508
    %v369 = vsel %vm368, %v367, %v364
    %s370 = scalar_lea.vmem %s0, 5
    %s371 = smov 192
    %v372 = vld [vmem:[%s370] ss:$16 sm:%s371]
    %vm373 = vcmask 1047558
    %v374 = vsel %vm373, %v372, %v369
    %375 = vrot.lane.b32.xlu0 %v374, 40
    %v376 = vpop.permute.xlu0 %375
    %vm377 = vcmask 392512
    %378 = vst.msk [vmem:[#allocation0] sm:$0x7] %vm377, %v376
    %s379 = scalar_lea.vmem [#allocation0], 5
    %380 = vst.msk [vmem:[%s379] sm:$0x38] %vm377, %v376
    %s381 = scalar_lea.vmem [#allocation0], 10
    %382 = vst.msk [vmem:[%s381] sm:$0xc0] %vm377, %v376
    %s383 = scalar_lea.vmem %s0, 133
    %v384 = vld [vmem:[%s383] sm:$0x1]
    %385 = vrot.lane.b32.xlu0 %v384, 40
    %v386 = vpop.permute.xlu0 %385
    %vm387 = vcmask 392512
    %s388 = scalar_lea.vmem [#allocation0], 18
    %389 = vst.msk [vmem:[%s388] sm:$0x1] %vm387, %v386
    %s390 = scalar_lea.vmem %s0, 4
    %s391 = smov 3
    %v392 = vld [vmem:[%s390] ss:$16 sm:%s391]
    %s393 = scalar_lea.vmem %s0, 4
    %s394 = smov 12
    %v395 = vld [vmem:[%s393] ss:$16 sm:%s394]
    %vm396 = vcmask 1043458
    %v397 = vsel %vm396, %v395, %v392
    %s398 = scalar_lea.vmem %s0, 4
    %s399 = smov 48
    %v400 = vld [vmem:[%s398] ss:$16 sm:%s399]
    %vm401 = vcmask 1045508
    %v402 = vsel %vm401, %v400, %v397
    %s403 = scalar_lea.vmem %s0, 4
    %s404 = smov 192
    %v405 = vld [vmem:[%s403] ss:$16 sm:%s404]
    %vm406 = vcmask 1047558
    %v407 = vsel %vm406, %v405, %v402
    %408 = vrot.lane.b32.xlu0 %v407, 32
    %v409 = vpop.permute.xlu0 %408
    %vm410 = vcmask 326912
    %411 = vst.msk [vmem:[#allocation0] sm:$0x7] %vm410, %v409
    %s412 = scalar_lea.vmem [#allocation0], 5
    %413 = vst.msk [vmem:[%s412] sm:$0x38] %vm410, %v409
    %s414 = scalar_lea.vmem [#allocation0], 10
    %415 = vst.msk [vmem:[%s414] sm:$0xc0] %vm410, %v409
    %s416 = scalar_lea.vmem %s0, 132
    %v417 = vld [vmem:[%s416] sm:$0x1]
    %418 = vrot.lane.b32.xlu0 %v417, 32
    %v419 = vpop.permute.xlu0 %418
    %vm420 = vcmask 326912
    %s421 = scalar_lea.vmem [#allocation0], 18
    %422 = vst.msk [vmem:[%s421] sm:$0x1] %vm420, %v419
    %s423 = scalar_lea.vmem %s0, 3
    %s424 = smov 3
    %v425 = vld [vmem:[%s423] ss:$16 sm:%s424]
    %s426 = scalar_lea.vmem %s0, 3
    %s427 = smov 12
    %v428 = vld [vmem:[%s426] ss:$16 sm:%s427]
    %vm429 = vcmask 1043458
    %v430 = vsel %vm429, %v428, %v425
    %s431 = scalar_lea.vmem %s0, 3
    %s432 = smov 48
    %v433 = vld [vmem:[%s431] ss:$16 sm:%s432]
    %vm434 = vcmask 1045508
    %v435 = vsel %vm434, %v433, %v430
    %s436 = scalar_lea.vmem %s0, 3
    %s437 = smov 192
    %v438 = vld [vmem:[%s436] ss:$16 sm:%s437]
    %vm439 = vcmask 1047558
    %v440 = vsel %vm439, %v438, %v435
    %441 = vrot.lane.b32.xlu0 %v440, 24
    %v442 = vpop.permute.xlu0 %441
    %vm443 = vcmask 261312
    %444 = vst.msk [vmem:[#allocation0] sm:$0x7] %vm443, %v442
    %s445 = scalar_lea.vmem [#allocation0], 5
    %446 = vst.msk [vmem:[%s445] sm:$0x38] %vm443, %v442
    %s447 = scalar_lea.vmem [#allocation0], 10
    %448 = vst.msk [vmem:[%s447] sm:$0xc0] %vm443, %v442
    %s449 = scalar_lea.vmem %s0, 131
    %v450 = vld [vmem:[%s449] sm:$0x1]
    %451 = vrot.lane.b32.xlu0 %v450, 24
    %v452 = vpop.permute.xlu0 %451
    %vm453 = vcmask 261312
    %s454 = scalar_lea.vmem [#allocation0], 18
    %455 = vst.msk [vmem:[%s454] sm:$0x1] %vm453, %v452
    %s456 = scalar_lea.vmem %s0, 2
    %s457 = smov 3
    %v458 = vld [vmem:[%s456] ss:$16 sm:%s457]
    %s459 = scalar_lea.vmem %s0, 2
    %s460 = smov 12
    %v461 = vld [vmem:[%s459] ss:$16 sm:%s460]
    %vm462 = vcmask 1043458
    %v463 = vsel %vm462, %v461, %v458
    %s464 = scalar_lea.vmem %s0, 2
    %s465 = smov 48
    %v466 = vld [vmem:[%s464] ss:$16 sm:%s465]
    %vm467 = vcmask 1045508
    %v468 = vsel %vm467, %v466, %v463
    %s469 = scalar_lea.vmem %s0, 2
    %s470 = smov 192
    %v471 = vld [vmem:[%s469] ss:$16 sm:%s470]
    %vm472 = vcmask 1047558
    %v473 = vsel %vm472, %v471, %v468
    %474 = vrot.lane.b32.xlu0 %v473, 16
    %v475 = vpop.permute.xlu0 %474
    %vm476 = vcmask 195712
    %477 = vst.msk [vmem:[#allocation0] sm:$0x7] %vm476, %v475
    %s478 = scalar_lea.vmem [#allocation0], 5
    %479 = vst.msk [vmem:[%s478] sm:$0x38] %vm476, %v475
    %s480 = scalar_lea.vmem [#allocation0], 10
    %481 = vst.msk [vmem:[%s480] sm:$0xc0] %vm476, %v475
    %s482 = scalar_lea.vmem %s0, 130
    %v483 = vld [vmem:[%s482] sm:$0x1]
    %484 = vrot.lane.b32.xlu0 %v483, 16
    %v485 = vpop.permute.xlu0 %484
    %vm486 = vcmask 195712
    %s487 = scalar_lea.vmem [#allocation0], 18
    %488 = vst.msk [vmem:[%s487] sm:$0x1] %vm486, %v485
    %s489 = scalar_lea.vmem %s0, 1
    %s490 = smov 3
    %v491 = vld [vmem:[%s489] ss:$16 sm:%s490]
    %s492 = scalar_lea.vmem %s0, 1
    %s493 = smov 12
    %v494 = vld [vmem:[%s492] ss:$16 sm:%s493]
    %vm495 = vcmask 1043458
    %v496 = vsel %vm495, %v494, %v491
    %s497 = scalar_lea.vmem %s0, 1
    %s498 = smov 48
    %v499 = vld [vmem:[%s497] ss:$16 sm:%s498]
    %vm500 = vcmask 1045508
    %v501 = vsel %vm500, %v499, %v496
    %s502 = scalar_lea.vmem %s0, 1
    %s503 = smov 192
    %v504 = vld [vmem:[%s502] ss:$16 sm:%s503]
    %vm505 = vcmask 1047558
    %v506 = vsel %vm505, %v504, %v501
    %507 = vrot.lane.b32.xlu0 %v506, 8
    %v508 = vpop.permute.xlu0 %507
    %vm509 = vcmask 130112
    %510 = vst.msk [vmem:[#allocation0] sm:$0x7] %vm509, %v508
    %s511 = scalar_lea.vmem [#allocation0], 5
    %512 = vst.msk [vmem:[%s511] sm:$0x38] %vm509, %v508
    %s513 = scalar_lea.vmem [#allocation0], 10
    %514 = vst.msk [vmem:[%s513] sm:$0xc0] %vm509, %v508
    %s515 = scalar_lea.vmem %s0, 129
    %v516 = vld [vmem:[%s515] sm:$0x1]
    %517 = vrot.lane.b32.xlu0 %v516, 8
    %v518 = vpop.permute.xlu0 %517
    %vm519 = vcmask 130112
    %s520 = scalar_lea.vmem [#allocation0], 18
    %521 = vst.msk [vmem:[%s520] sm:$0x1] %vm519, %v518
    %s523 = sshll.u32 1, 4
    %s524 = ssub.s32 %s523, 1
    %v526 = vld [vmem:[#allocation0] sm:%s524]
    %s527 = sshll.u32 1, 4
    %s528 = ssub.s32 %s527, 1
    %529 = vst [vmem:[%s1] sm:%s528] %v526
    %s530 = scalar_lea.vmem [#allocation0], 8
    %v531 = vld [vmem:[%s530] sm:%s524]
    %s532 = sshll.u32 1, 4
    %s533 = ssub.s32 %s532, 1
    %s534 = scalar_lea.vmem %s1, 4
    %535 = vst [vmem:[%s534] sm:%s533] %v531
    %s536 = scalar_lea.vmem [#allocation0], 16
    %v537 = vld [vmem:[%s536] sm:%s524]
    %s538 = sshll.u32 1, 4
    %s539 = ssub.s32 %s538, 1
    %s540 = smul.addr 4, 2
    %s541 = scalar_lea.vmem %s1, %s540
    %542 = vst [vmem:[%s541] sm:%s539] %v537

// kernel: a_call__.1
$region0: #{a_call__.1}
  #allocation0 [shape = 'u32[]', space=smem, size = 0x4, offset = 0x4, fixed_abs, tag = 'smem constant byte address 0x4 - core index']
  #allocation1 [shape = 'u32[144,128]{1,0:T(1,128)}', space=vmem, size = 0x12000, scoped, tag = 'internal scratch']
  #allocation2 [shape = 'f32[2,18,128]{2,1,0:T(8,128)}', space=vmem, size = 0x6000, scoped, tag = 'scratch operand']
  %s0 = inlined_call_operand.vmem [shape: f32[32,128], index: 0, kind: input, shape index: {}]
  %s1 = inlined_call_operand.vmem [shape: f32[3,3,128], index: 1, kind: input, shape index: {}]
  %s2 = inlined_call_operand.vmem [shape: f32[15,128], index: 2, kind: input, shape index: {}]
  %s3 = inlined_call_operand.vmem [shape: f32[3,3,128], index: 3, kind: input, shape index: {}]
  %s4 = inlined_call_operand.vmem [shape: f32[15,128], index: 4, kind: input, shape index: {}]
  %s5 = inlined_call_operand.vmem [shape: f32[32,128], index: 5, kind: output, shape index: {}]
  %s6 = sld [smem:[#allocation0]]
  $region30: #{a_call__.1} parent=0
    _
  %s8 = ssub.s32 1, %s6
  %s9 = scalar_select 0, %s8, %s6
  // Predicated region
  $region2: #{a_call__.1} parent=0 // pred_check
    _
  $region3: #{a_call__.1} parent=0 // pred_check_branch
    %11 = sbr.rel (0) target = $region5
  $region4: #{a_call__.1} parent=0 // pred_region
    _
  $region5: #{a_call__.1} parent=0 // pred_fallthru
    _
  // Predicated region
  $region6: #{a_call__.1} parent=0 // pred_check
    _
  $region7: #{a_call__.1} parent=0 // pred_check_branch
    %13 = sbr.rel (0) target = $region9
  $region8: #{a_call__.1} parent=0 // pred_region
    _
  $region9: #{a_call__.1} parent=0 // pred_fallthru
    _
  // Predicated region
  $region10: #{a_call__.1} parent=0 // pred_check
    _
  $region11: #{a_call__.1} parent=0 // pred_check_branch
    %15 = sbr.rel (0) target = $region13
  $region12: #{a_call__.1} parent=0 // pred_region
    _
  $region13: #{a_call__.1} parent=0 // pred_fallthru
    _
  // Predicated region
  $region14: #{a_call__.1} parent=0 // pred_check
    _
  $region15: #{a_call__.1} parent=0 // pred_check_branch
    %17 = sbr.rel (0) target = $region17
  $region16: #{a_call__.1} parent=0 // pred_region
    _
  $region17: #{a_call__.1} parent=0 // pred_fallthru
    _
  // Predicated region
  $region18: #{a_call__.1} parent=0 // pred_check
    _
  $region19: #{a_call__.1} parent=0 // pred_check_branch
    %19 = sbr.rel (0) target = $region21
  $region20: #{a_call__.1} parent=0 // pred_region
    _
  $region21: #{a_call__.1} parent=0 // pred_fallthru
    _
  %v20 = vld [vmem:[%s0] sm:$0xff]
  %v21 = vld [vmem:[%s0 + $0x8] sm:$0xff]
  %v22 = vld [vmem:[%s0 + $0x10] sm:$0xff]
  %v23 = vld [vmem:[%s0 + $0x18] sm:$0xff]
  %v24 = vmax.f32 %v20, 0.0
  %v25 = vmax.f32 %v21, 0.0
  %v26 = vmax.f32 %v22, 0.0
  %v27 = vmax.f32 %v23, 0.0
  %28 = vst [vmem:[#allocation2] sm:$0x1] 0.0
  %29 = vst [vmem:[#allocation2 + $0x18] sm:$0x1] 0.0
  %30 = vst [vmem:[#allocation2 + $0x11] sm:$0x1] 0.0
  %31 = vst [vmem:[#allocation2 + $0x29] sm:$0x1] 0.0
  %32 = vst [vmem:[#allocation2 + $0x1] sm:$0xff] %v24
  %33 = vst [vmem:[#allocation2 + $0x9] sm:$0xff] %v25
  %34 = vst [vmem:[#allocation2 + $0x19] sm:$0xff] %v26
  %35 = vst [vmem:[#allocation2 + $0x21] sm:$0xff] %v27
  %v36 = vld [vmem:[#allocation2] sm:$0xff]
  %v37 = vld [vmem:[#allocation2 + $0x8] sm:$0xff]
  %v38 = vld [vmem:[#allocation2 + $0x18] sm:$0xff]
  %v39 = vld [vmem:[#allocation2 + $0x20] sm:$0xff]
  %40 = vrot.lane.b32.xlu0 %v36, 8
  %v41 = vpop.permute.xlu0 %40
  %42 = vrot.lane.b32.xlu0 %v37, 8
  %v43 = vpop.permute.xlu0 %42
  %44 = vrot.lane.b32.xlu0 %v38, 8
  %v45 = vpop.permute.xlu0 %44
  %46 = vrot.lane.b32.xlu0 %v39, 8
  %v47 = vpop.permute.xlu0 %46
  %v48 = vld [vmem:[%s1] sm:$0x1]
  %v49 = vlaneseq
  %v50 = vshrl.u32 %v49, 7
  %v51 = vsub.s32 0, %v50
  %v52 = vrot.slane %v48, %v51
  %v53 = vmul.f32 %v41, %v52
  %v54 = vmul.f32 %v43, %v52
  %v55 = vmul.f32 %v45, %v52
  %v56 = vmul.f32 %v47, %v52
  %v57 = vadd.f32 %v53, 0.0
  %v58 = vadd.f32 %v54, 0.0
  %v59 = vadd.f32 %v55, 0.0
  %v60 = vadd.f32 %v56, 0.0
  %v61 = vld [vmem:[%s1 + $0x1] sm:$0x1]
  %v62 = vlaneseq
  %v63 = vshrl.u32 %v62, 7
  %v64 = vsub.s32 0, %v63
  %v65 = vrot.slane %v61, %v64
  %v66 = vmul.f32 %v36, %v65
  %v67 = vmul.f32 %v37, %v65
  %v68 = vmul.f32 %v38, %v65
  %v69 = vmul.f32 %v39, %v65
  %v70 = vadd.f32 %v57, %v66
  %v71 = vadd.f32 %v58, %v67
  %v72 = vadd.f32 %v59, %v68
  %v73 = vadd.f32 %v60, %v69
  %74 = vrot.lane.b32.xlu0 %v36, 120
  %v75 = vpop.permute.xlu0 %74
  %76 = vrot.lane.b32.xlu0 %v37, 120
  %v77 = vpop.permute.xlu0 %76
  %78 = vrot.lane.b32.xlu0 %v38, 120
  %v79 = vpop.permute.xlu0 %78
  %80 = vrot.lane.b32.xlu0 %v39, 120
  %v81 = vpop.permute.xlu0 %80
  %v82 = vld [vmem:[%s1 + $0x2] sm:$0x1]
  %v83 = vlaneseq
  %v84 = vshrl.u32 %v83, 7
  %v85 = vsub.s32 0, %v84
  %v86 = vrot.slane %v82, %v85
  %v87 = vmul.f32 %v75, %v86
  %v88 = vmul.f32 %v77, %v86
  %v89 = vmul.f32 %v79, %v86
  %v90 = vmul.f32 %v81, %v86
  %v91 = vadd.f32 %v70, %v87
  %v92 = vadd.f32 %v71, %v88
  %v93 = vadd.f32 %v72, %v89
  %v94 = vadd.f32 %v73, %v90
  %v95 = vld [vmem:[#allocation2 + $0x1] sm:$0xff]
  %v96 = vld [vmem:[#allocation2 + $0x9] sm:$0xff]
  %v97 = vld [vmem:[#allocation2 + $0x19] sm:$0xff]
  %v98 = vld [vmem:[#allocation2 + $0x21] sm:$0xff]
  %99 = vrot.lane.b32.xlu0 %v95, 8
  %v100 = vpop.permute.xlu0 %99
  %101 = vrot.lane.b32.xlu0 %v96, 8
  %v102 = vpop.permute.xlu0 %101
  %103 = vrot.lane.b32.xlu0 %v97, 8
  %v104 = vpop.permute.xlu0 %103
  %105 = vrot.lane.b32.xlu0 %v98, 8
  %v106 = vpop.permute.xlu0 %105
  %s107 = scalar_lea.vmem %s1, 4
  %v108 = vld [vmem:[%s107] sm:$0x1]
  %v109 = vlaneseq
  %v110 = vshrl.u32 %v109, 7
  %v111 = vsub.s32 0, %v110
  %v112 = vrot.slane %v108, %v111
  %v113 = vmul.f32 %v100, %v112
  %v114 = vmul.f32 %v102, %v112
  %v115 = vmul.f32 %v104, %v112
  %v116 = vmul.f32 %v106, %v112
  %v117 = vadd.f32 %v91, %v113
  %v118 = vadd.f32 %v92, %v114
  %v119 = vadd.f32 %v93, %v115
  %v120 = vadd.f32 %v94, %v116
  %v121 = vld [vmem:[%s107 + $0x1] sm:$0x1]
  %v122 = vlaneseq
  %v123 = vshrl.u32 %v122, 7
  %v124 = vsub.s32 0, %v123
  %v125 = vrot.slane %v121, %v124
  %v126 = vmul.f32 %v95, %v125
  %v127 = vmul.f32 %v96, %v125
  %v128 = vmul.f32 %v97, %v125
  %v129 = vmul.f32 %v98, %v125
  %v130 = vadd.f32 %v117, %v126
  %v131 = vadd.f32 %v118, %v127
  %v132 = vadd.f32 %v119, %v128
  %v133 = vadd.f32 %v120, %v129
  %134 = vrot.lane.b32.xlu0 %v95, 120
  %v135 = vpop.permute.xlu0 %134
  %136 = vrot.lane.b32.xlu0 %v96, 120
  %v137 = vpop.permute.xlu0 %136
  %138 = vrot.lane.b32.xlu0 %v97, 120
  %v139 = vpop.permute.xlu0 %138
  %140 = vrot.lane.b32.xlu0 %v98, 120
  %v141 = vpop.permute.xlu0 %140
  %v142 = vld [vmem:[%s107 + $0x2] sm:$0x1]
  %v143 = vlaneseq
  %v144 = vshrl.u32 %v143, 7
  %v145 = vsub.s32 0, %v144
  %v146 = vrot.slane %v142, %v145
  %v147 = vmul.f32 %v135, %v146
  %v148 = vmul.f32 %v137, %v146
  %v149 = vmul.f32 %v139, %v146
  %v150 = vmul.f32 %v141, %v146
  %v151 = vadd.f32 %v130, %v147
  %v152 = vadd.f32 %v131, %v148
  %v153 = vadd.f32 %v132, %v149
  %v154 = vadd.f32 %v133, %v150
  %v155 = vld [vmem:[#allocation2 + $0x2] sm:$0xff]
  %v156 = vld [vmem:[#allocation2 + $0xa] sm:$0xff]
  %v157 = vld [vmem:[#allocation2 + $0x1a] sm:$0xff]
  %v158 = vld [vmem:[#allocation2 + $0x22] sm:$0xff]
  %159 = vrot.lane.b32.xlu0 %v155, 8
  %v160 = vpop.permute.xlu0 %159
  %161 = vrot.lane.b32.xlu0 %v156, 8
  %v162 = vpop.permute.xlu0 %161
  %163 = vrot.lane.b32.xlu0 %v157, 8
  %v164 = vpop.permute.xlu0 %163
  %165 = vrot.lane.b32.xlu0 %v158, 8
  %v166 = vpop.permute.xlu0 %165
  %s167 = scalar_lea.vmem %s1, 8
  %v168 = vld [vmem:[%s167] sm:$0x1]
  %v169 = vlaneseq
  %v170 = vshrl.u32 %v169, 7
  %v171 = vsub.s32 0, %v170
  %v172 = vrot.slane %v168, %v171
  %v173 = vmul.f32 %v160, %v172
  %v174 = vmul.f32 %v162, %v172
  %v175 = vmul.f32 %v164, %v172
  %v176 = vmul.f32 %v166, %v172
  %v177 = vadd.f32 %v151, %v173
  %v178 = vadd.f32 %v152, %v174
  %v179 = vadd.f32 %v153, %v175
  %v180 = vadd.f32 %v154, %v176
  %v181 = vld [vmem:[%s167 + $0x1] sm:$0x1]
  %v182 = vlaneseq
  %v183 = vshrl.u32 %v182, 7
  %v184 = vsub.s32 0, %v183
  %v185 = vrot.slane %v181, %v184
  %v186 = vmul.f32 %v155, %v185
  %v187 = vmul.f32 %v156, %v185
  %v188 = vmul.f32 %v157, %v185
  %v189 = vmul.f32 %v158, %v185
  %v190 = vadd.f32 %v177, %v186
  %v191 = vadd.f32 %v178, %v187
  %v192 = vadd.f32 %v179, %v188
  %v193 = vadd.f32 %v180, %v189
  %194 = vrot.lane.b32.xlu0 %v155, 120
  %v195 = vpop.permute.xlu0 %194
  %196 = vrot.lane.b32.xlu0 %v156, 120
  %v197 = vpop.permute.xlu0 %196
  %198 = vrot.lane.b32.xlu0 %v157, 120
  %v199 = vpop.permute.xlu0 %198
  %200 = vrot.lane.b32.xlu0 %v158, 120
  %v201 = vpop.permute.xlu0 %200
  %v202 = vld [vmem:[%s167 + $0x2] sm:$0x1]
  %v203 = vlaneseq
  %v204 = vshrl.u32 %v203, 7
  %v205 = vsub.s32 0, %v204
  %v206 = vrot.slane %v202, %v205
  %v207 = vmul.f32 %v195, %v206
  %v208 = vmul.f32 %v197, %v206
  %v209 = vmul.f32 %v199, %v206
  %v210 = vmul.f32 %v201, %v206
  %v211 = vadd.f32 %v190, %v207
  %v212 = vadd.f32 %v191, %v208
  %v213 = vadd.f32 %v192, %v209
  %v214 = vadd.f32 %v193, %v210
  %215 = vrot.lane.b32.xlu0 %v211, 121
  %v216 = vpop.permute.xlu0 %215
  %217 = vrot.lane.b32.xlu0 %v212, 121
  %v218 = vpop.permute.xlu0 %217
  %219 = vrot.lane.b32.xlu0 %v213, 121
  %v220 = vpop.permute.xlu0 %219
  %221 = vrot.lane.b32.xlu0 %v214, 121
  %v222 = vpop.permute.xlu0 %221
  %v223 = vld [vmem:[%s2] sm:$0x1]
  %v224 = vlaneseq
  %v225 = vshrl.u32 %v224, 7
  %v226 = vsub.s32 0, %v225
  %v227 = vrot.slane %v223, %v226
  %v228 = vmul.f32 %v216, %v227
  %v229 = vmul.f32 %v218, %v227
  %v230 = vmul.f32 %v220, %v227
  %v231 = vmul.f32 %v222, %v227
  %v232 = vadd.f32 %v228, 0.0
  %v233 = vadd.f32 %v229, 0.0
  %v234 = vadd.f32 %v230, 0.0
  %v235 = vadd.f32 %v231, 0.0
  %236 = vrot.lane.b32.xlu0 %v211, 122
  %v237 = vpop.permute.xlu0 %236
  %238 = vrot.lane.b32.xlu0 %v212, 122
  %v239 = vpop.permute.xlu0 %238
  %240 = vrot.lane.b32.xlu0 %v213, 122
  %v241 = vpop.permute.xlu0 %240
  %242 = vrot.lane.b32.xlu0 %v214, 122
  %v243 = vpop.permute.xlu0 %242
  %v244 = vld [vmem:[%s2 + $0x1] sm:$0x1]
  %v245 = vlaneseq
  %v246 = vshrl.u32 %v245, 7
  %v247 = vsub.s32 0, %v246
  %v248 = vrot.slane %v244, %v247
  %v249 = vmul.f32 %v237, %v248
  %v250 = vmul.f32 %v239, %v248
  %v251 = vmul.f32 %v241, %v248
  %v252 = vmul.f32 %v243, %v248
  %v253 = vadd.f32 %v232, %v249
  %v254 = vadd.f32 %v233, %v250
  %v255 = vadd.f32 %v234, %v251
  %v256 = vadd.f32 %v235, %v252
  %257 = vrot.lane.b32.xlu0 %v211, 123
  %v258 = vpop.permute.xlu0 %257
  %259 = vrot.lane.b32.xlu0 %v212, 123
  %v260 = vpop.permute.xlu0 %259
  %261 = vrot.lane.b32.xlu0 %v213, 123
  %v262 = vpop.permute.xlu0 %261
  %263 = vrot.lane.b32.xlu0 %v214, 123
  %v264 = vpop.permute.xlu0 %263
  %v265 = vld [vmem:[%s2 + $0x2] sm:$0x1]
  %v266 = vlaneseq
  %v267 = vshrl.u32 %v266, 7
  %v268 = vsub.s32 0, %v267
  %v269 = vrot.slane %v265, %v268
  %v270 = vmul.f32 %v258, %v269
  %v271 = vmul.f32 %v260, %v269
  %v272 = vmul.f32 %v262, %v269
  %v273 = vmul.f32 %v264, %v269
  %v274 = vadd.f32 %v253, %v270
  %v275 = vadd.f32 %v254, %v271
  %v276 = vadd.f32 %v255, %v272
  %v277 = vadd.f32 %v256, %v273
  %278 = vrot.lane.b32.xlu0 %v211, 124
  %v279 = vpop.permute.xlu0 %278
  %280 = vrot.lane.b32.xlu0 %v212, 124
  %v281 = vpop.permute.xlu0 %280
  %282 = vrot.lane.b32.xlu0 %v213, 124
  %v283 = vpop.permute.xlu0 %282
  %284 = vrot.lane.b32.xlu0 %v214, 124
  %v285 = vpop.permute.xlu0 %284
  %v286 = vld [vmem:[%s2 + $0x3] sm:$0x1]
  %v287 = vlaneseq
  %v288 = vshrl.u32 %v287, 7
  %v289 = vsub.s32 0, %v288
  %v290 = vrot.slane %v286, %v289
  %v291 = vmul.f32 %v279, %v290
  %v292 = vmul.f32 %v281, %v290
  %v293 = vmul.f32 %v283, %v290
  %v294 = vmul.f32 %v285, %v290
  %v295 = vadd.f32 %v274, %v291
  %v296 = vadd.f32 %v275, %v292
  %v297 = vadd.f32 %v276, %v293
  %v298 = vadd.f32 %v277, %v294
  %299 = vrot.lane.b32.xlu0 %v211, 125
  %v300 = vpop.permute.xlu0 %299
  %301 = vrot.lane.b32.xlu0 %v212, 125
  %v302 = vpop.permute.xlu0 %301
  %303 = vrot.lane.b32.xlu0 %v213, 125
  %v304 = vpop.permute.xlu0 %303
  %305 = vrot.lane.b32.xlu0 %v214, 125
  %v306 = vpop.permute.xlu0 %305
  %v307 = vld [vmem:[%s2 + $0x4] sm:$0x1]
  %v308 = vlaneseq
  %v309 = vshrl.u32 %v308, 7
  %v310 = vsub.s32 0, %v309
  %v311 = vrot.slane %v307, %v310
  %v312 = vmul.f32 %v300, %v311
  %v313 = vmul.f32 %v302, %v311
  %v314 = vmul.f32 %v304, %v311
  %v315 = vmul.f32 %v306, %v311
  %v316 = vadd.f32 %v295, %v312
  %v317 = vadd.f32 %v296, %v313
  %v318 = vadd.f32 %v297, %v314
  %v319 = vadd.f32 %v298, %v315
  %320 = vrot.lane.b32.xlu0 %v211, 126
  %v321 = vpop.permute.xlu0 %320
  %322 = vrot.lane.b32.xlu0 %v212, 126
  %v323 = vpop.permute.xlu0 %322
  %324 = vrot.lane.b32.xlu0 %v213, 126
  %v325 = vpop.permute.xlu0 %324
  %326 = vrot.lane.b32.xlu0 %v214, 126
  %v327 = vpop.permute.xlu0 %326
  %v328 = vld [vmem:[%s2 + $0x5] sm:$0x1]
  %v329 = vlaneseq
  %v330 = vshrl.u32 %v329, 7
  %v331 = vsub.s32 0, %v330
  %v332 = vrot.slane %v328, %v331
  %v333 = vmul.f32 %v321, %v332
  %v334 = vmul.f32 %v323, %v332
  %v335 = vmul.f32 %v325, %v332
  %v336 = vmul.f32 %v327, %v332
  %v337 = vadd.f32 %v316, %v333
  %v338 = vadd.f32 %v317, %v334
  %v339 = vadd.f32 %v318, %v335
  %v340 = vadd.f32 %v319, %v336
  %341 = vrot.lane.b32.xlu0 %v211, 127
  %v342 = vpop.permute.xlu0 %341
  %343 = vrot.lane.b32.xlu0 %v212, 127
  %v344 = vpop.permute.xlu0 %343
  %345 = vrot.lane.b32.xlu0 %v213, 127
  %v346 = vpop.permute.xlu0 %345
  %347 = vrot.lane.b32.xlu0 %v214, 127
  %v348 = vpop.permute.xlu0 %347
  %v349 = vld [vmem:[%s2 + $0x6] sm:$0x1]
  %v350 = vlaneseq
  %v351 = vshrl.u32 %v350, 7
  %v352 = vsub.s32 0, %v351
  %v353 = vrot.slane %v349, %v352
  %v354 = vmul.f32 %v342, %v353
  %v355 = vmul.f32 %v344, %v353
  %v356 = vmul.f32 %v346, %v353
  %v357 = vmul.f32 %v348, %v353
  %v358 = vadd.f32 %v337, %v354
  %v359 = vadd.f32 %v338, %v355
  %v360 = vadd.f32 %v339, %v356
  %v361 = vadd.f32 %v340, %v357
  %v362 = vld [vmem:[%s2 + $0x7] sm:$0x1]
  %v363 = vlaneseq
  %v364 = vshrl.u32 %v363, 7
  %v365 = vsub.s32 0, %v364
  %v366 = vrot.slane %v362, %v365
  %v367 = vmul.f32 %v211, %v366
  %v368 = vmul.f32 %v212, %v366
  %v369 = vmul.f32 %v213, %v366
  %v370 = vmul.f32 %v214, %v366
  %v371 = vadd.f32 %v358, %v367
  %v372 = vadd.f32 %v359, %v368
  %v373 = vadd.f32 %v360, %v369
  %v374 = vadd.f32 %v361, %v370
  %375 = vrot.lane.b32.xlu0 %v211, 1
  %v376 = vpop.permute.xlu0 %375
  %377 = vrot.lane.b32.xlu0 %v212, 1
  %v378 = vpop.permute.xlu0 %377
  %379 = vrot.lane.b32.xlu0 %v213, 1
  %v380 = vpop.permute.xlu0 %379
  %381 = vrot.lane.b32.xlu0 %v214, 1
  %v382 = vpop.permute.xlu0 %381
  %v383 = vld [vmem:[%s2 + $0x8] sm:$0x1]
  %v384 = vlaneseq
  %v385 = vshrl.u32 %v384, 7
  %v386 = vsub.s32 0, %v385
  %v387 = vrot.slane %v383, %v386
  %v388 = vmul.f32 %v376, %v387
  %v389 = vmul.f32 %v378, %v387
  %v390 = vmul.f32 %v380, %v387
  %v391 = vmul.f32 %v382, %v387
  %v392 = vadd.f32 %v371, %v388
  %v393 = vadd.f32 %v372, %v389
  %v394 = vadd.f32 %v373, %v390
  %v395 = vadd.f32 %v374, %v391
  %396 = vrot.lane.b32.xlu0 %v211, 2
  %v397 = vpop.permute.xlu0 %396
  %398 = vrot.lane.b32.xlu0 %v212, 2
  %v399 = vpop.permute.xlu0 %398
  %400 = vrot.lane.b32.xlu0 %v213, 2
  %v401 = vpop.permute.xlu0 %400
  %402 = vrot.lane.b32.xlu0 %v214, 2
  %v403 = vpop.permute.xlu0 %402
  %v404 = vld [vmem:[%s2 + $0x9] sm:$0x1]
  %v405 = vlaneseq
  %v406 = vshrl.u32 %v405, 7
  %v407 = vsub.s32 0, %v406
  %v408 = vrot.slane %v404, %v407
  %v409 = vmul.f32 %v397, %v408
  %v410 = vmul.f32 %v399, %v408
  %v411 = vmul.f32 %v401, %v408
  %v412 = vmul.f32 %v403, %v408
  %v413 = vadd.f32 %v392, %v409
  %v414 = vadd.f32 %v393, %v410
  %v415 = vadd.f32 %v394, %v411
  %v416 = vadd.f32 %v395, %v412
  %417 = vrot.lane.b32.xlu0 %v211, 3
  %v418 = vpop.permute.xlu0 %417
  %419 = vrot.lane.b32.xlu0 %v212, 3
  %v420 = vpop.permute.xlu0 %419
  %421 = vrot.lane.b32.xlu0 %v213, 3
  %v422 = vpop.permute.xlu0 %421
  %423 = vrot.lane.b32.xlu0 %v214, 3
  %v424 = vpop.permute.xlu0 %423
  %v425 = vld [vmem:[%s2 + $0xa] sm:$0x1]
  %v426 = vlaneseq
  %v427 = vshrl.u32 %v426, 7
  %v428 = vsub.s32 0, %v427
  %v429 = vrot.slane %v425, %v428
  %v430 = vmul.f32 %v418, %v429
  %v431 = vmul.f32 %v420, %v429
  %v432 = vmul.f32 %v422, %v429
  %v433 = vmul.f32 %v424, %v429
  %v434 = vadd.f32 %v413, %v430
  %v435 = vadd.f32 %v414, %v431
  %v436 = vadd.f32 %v415, %v432
  %v437 = vadd.f32 %v416, %v433
  %438 = vrot.lane.b32.xlu0 %v211, 4
  %v439 = vpop.permute.xlu0 %438
  %440 = vrot.lane.b32.xlu0 %v212, 4
  %v441 = vpop.permute.xlu0 %440
  %442 = vrot.lane.b32.xlu0 %v213, 4
  %v443 = vpop.permute.xlu0 %442
  %444 = vrot.lane.b32.xlu0 %v214, 4
  %v445 = vpop.permute.xlu0 %444
  %v446 = vld [vmem:[%s2 + $0xb] sm:$0x1]
  %v447 = vlaneseq
  %v448 = vshrl.u32 %v447, 7
  %v449 = vsub.s32 0, %v448
  %v450 = vrot.slane %v446, %v449
  %v451 = vmul.f32 %v439, %v450
  %v452 = vmul.f32 %v441, %v450
  %v453 = vmul.f32 %v443, %v450
  %v454 = vmul.f32 %v445, %v450
  %v455 = vadd.f32 %v434, %v451
  %v456 = vadd.f32 %v435, %v452
  %v457 = vadd.f32 %v436, %v453
  %v458 = vadd.f32 %v437, %v454
  %459 = vrot.lane.b32.xlu0 %v211, 5
  %v460 = vpop.permute.xlu0 %459
  %461 = vrot.lane.b32.xlu0 %v212, 5
  %v462 = vpop.permute.xlu0 %461
  %463 = vrot.lane.b32.xlu0 %v213, 5
  %v464 = vpop.permute.xlu0 %463
  %465 = vrot.lane.b32.xlu0 %v214, 5
  %v466 = vpop.permute.xlu0 %465
  %v467 = vld [vmem:[%s2 + $0xc] sm:$0x1]
  %v468 = vlaneseq
  %v469 = vshrl.u32 %v468, 7
  %v470 = vsub.s32 0, %v469
  %v471 = vrot.slane %v467, %v470
  %v472 = vmul.f32 %v460, %v471
  %v473 = vmul.f32 %v462, %v471
  %v474 = vmul.f32 %v464, %v471
  %v475 = vmul.f32 %v466, %v471
  %v476 = vadd.f32 %v455, %v472
  %v477 = vadd.f32 %v456, %v473
  %v478 = vadd.f32 %v457, %v474
  %v479 = vadd.f32 %v458, %v475
  %480 = vrot.lane.b32.xlu0 %v211, 6
  %v481 = vpop.permute.xlu0 %480
  %482 = vrot.lane.b32.xlu0 %v212, 6
  %v483 = vpop.permute.xlu0 %482
  %484 = vrot.lane.b32.xlu0 %v213, 6
  %v485 = vpop.permute.xlu0 %484
  %486 = vrot.lane.b32.xlu0 %v214, 6
  %v487 = vpop.permute.xlu0 %486
  %v488 = vld [vmem:[%s2 + $0xd] sm:$0x1]
  %v489 = vlaneseq
  %v490 = vshrl.u32 %v489, 7
  %v491 = vsub.s32 0, %v490
  %v492 = vrot.slane %v488, %v491
  %v493 = vmul.f32 %v481, %v492
  %v494 = vmul.f32 %v483, %v492
  %v495 = vmul.f32 %v485, %v492
  %v496 = vmul.f32 %v487, %v492
  %v497 = vadd.f32 %v476, %v493
  %v498 = vadd.f32 %v477, %v494
  %v499 = vadd.f32 %v478, %v495
  %v500 = vadd.f32 %v479, %v496
  %501 = vrot.lane.b32.xlu0 %v211, 7
  %v502 = vpop.permute.xlu0 %501
  %503 = vrot.lane.b32.xlu0 %v212, 7
  %v504 = vpop.permute.xlu0 %503
  %505 = vrot.lane.b32.xlu0 %v213, 7
  %v506 = vpop.permute.xlu0 %505
  %507 = vrot.lane.b32.xlu0 %v214, 7
  %v508 = vpop.permute.xlu0 %507
  %v509 = vld [vmem:[%s2 + $0xe] sm:$0x1]
  %v510 = vlaneseq
  %v511 = vshrl.u32 %v510, 7
  %v512 = vsub.s32 0, %v511
  %v513 = vrot.slane %v509, %v512
  %v514 = vmul.f32 %v502, %v513
  %v515 = vmul.f32 %v504, %v513
  %v516 = vmul.f32 %v506, %v513
  %v517 = vmul.f32 %v508, %v513
  %v518 = vadd.f32 %v497, %v514
  %v519 = vadd.f32 %v498, %v515
  %v520 = vadd.f32 %v499, %v516
  %v521 = vadd.f32 %v500, %v517
  %v522 = vadd.f32 %v518, %v519
  %v523 = vadd.f32 %v522, %v520
  %v524 = vadd.f32 %v523, %v521
  %v525 = vrot.slane %v524, 4
  %v526 = vadd.f32 %v524, %v525
  %v527 = vrot.slane %v526, 2
  %v528 = vadd.f32 %v526, %v527
  %v529 = vrot.slane %v528, 1
  %v530 = vadd.f32 %v528, %v529
  %531 = vrot.lane.b32.xlu0 %v530, 8
  %v532 = vpop.permute.xlu0 %531
  %v533 = vadd.f32 %v530, %v532
  %534 = vrot.lane.b32.xlu0 %v533, 16
  %v535 = vpop.permute.xlu0 %534
  %v536 = vadd.f32 %v533, %v535
  %537 = vrot.lane.b32.xlu0 %v536, 32
  %v538 = vpop.permute.xlu0 %537
  %v539 = vadd.f32 %v536, %v538
  %540 = vrot.lane.b32.xlu0 %v539, 64
  %v541 = vpop.permute.xlu0 %540
  %v542 = vadd.f32 %v539, %v541
  %v543 = vmul.f32 %v542, 0.001953125
  %v544 = vlaneseq
  %v545 = vshrl.u32 %v544, 7
  %v546 = vsub.s32 0, %v545
  %v547 = vrot.slane %v543, %v546
  %v548 = vsub.f32 %v518, %v547
  %v549 = vsub.f32 %v519, %v547
  %v550 = vsub.f32 %v520, %v547
  %v551 = vsub.f32 %v521, %v547
  %v552 = vmul.f32 %v548, %v548
  %v553 = vmul.f32 %v549, %v549
  %v554 = vmul.f32 %v550, %v550
  %v555 = vmul.f32 %v551, %v551
  %v556 = vadd.f32 %v552, %v553
  %v557 = vadd.f32 %v556, %v554
  %v558 = vadd.f32 %v557, %v555
  %v559 = vrot.slane %v558, 4
  %v560 = vadd.f32 %v558, %v559
  %v561 = vrot.slane %v560, 2
  %v562 = vadd.f32 %v560, %v561
  %v563 = vrot.slane %v562, 1
  %v564 = vadd.f32 %v562, %v563
  %565 = vrot.lane.b32.xlu0 %v564, 8
  %v566 = vpop.permute.xlu0 %565
  %v567 = vadd.f32 %v564, %v566
  %568 = vrot.lane.b32.xlu0 %v567, 16
  %v569 = vpop.permute.xlu0 %568
  %v570 = vadd.f32 %v567, %v569
  %571 = vrot.lane.b32.xlu0 %v570, 32
  %v572 = vpop.permute.xlu0 %571
  %v573 = vadd.f32 %v570, %v572
  %574 = vrot.lane.b32.xlu0 %v573, 64
  %v575 = vpop.permute.xlu0 %574
  %v576 = vadd.f32 %v573, %v575
  %v577 = vmul.f32 %v576, 0.001953125
  %v578 = vadd.f32 %v577, 1e-05
  %v579 = vrsqrt.pop %v578
  %v580 = vlaneseq
  %v581 = vshrl.u32 %v580, 7
  %v582 = vsub.s32 0, %v581
  %v583 = vrot.slane %v579, %v582
  %v584 = vmul.f32 %v548, %v583
  %v585 = vmul.f32 %v549, %v583
  %v586 = vmul.f32 %v550, %v583
  %v587 = vmul.f32 %v551, %v583
  %v588 = vmax.f32 %v584, 0.0
  %v589 = vmax.f32 %v585, 0.0
  %v590 = vmax.f32 %v586, 0.0
  %v591 = vmax.f32 %v587, 0.0
  %592 = vst [vmem:[#allocation2] sm:$0x1] 0.0
  %593 = vst [vmem:[#allocation2 + $0x18] sm:$0x1] 0.0
  %594 = vst [vmem:[#allocation2 + $0x11] sm:$0x1] 0.0
  %595 = vst [vmem:[#allocation2 + $0x29] sm:$0x1] 0.0
  %596 = vst [vmem:[#allocation2 + $0x1] sm:$0xff] %v588
  %597 = vst [vmem:[#allocation2 + $0x9] sm:$0xff] %v589
  %598 = vst [vmem:[#allocation2 + $0x19] sm:$0xff] %v590
  %599 = vst [vmem:[#allocation2 + $0x21] sm:$0xff] %v591
  %v600 = vld [vmem:[#allocation2] sm:$0xff]
  %v601 = vld [vmem:[#allocation2 + $0x8] sm:$0xff]
  %v602 = vld [vmem:[#allocation2 + $0x18] sm:$0xff]
  %v603 = vld [vmem:[#allocation2 + $0x20] sm:$0xff]
  %604 = vrot.lane.b32.xlu0 %v600, 8
  %v605 = vpop.permute.xlu0 %604
  %606 = vrot.lane.b32.xlu0 %v601, 8
  %v607 = vpop.permute.xlu0 %606
  %608 = vrot.lane.b32.xlu0 %v602, 8
  %v609 = vpop.permute.xlu0 %608
  %610 = vrot.lane.b32.xlu0 %v603, 8
  %v611 = vpop.permute.xlu0 %610
  %v612 = vld [vmem:[%s3] sm:$0x1]
  %v613 = vlaneseq
  %v614 = vshrl.u32 %v613, 7
  %v615 = vsub.s32 0, %v614
  %v616 = vrot.slane %v612, %v615
  %v617 = vmul.f32 %v605, %v616
  %v618 = vmul.f32 %v607, %v616
  %v619 = vmul.f32 %v609, %v616
  %v620 = vmul.f32 %v611, %v616
  %v621 = vadd.f32 %v617, 0.0
  %v622 = vadd.f32 %v618, 0.0
  %v623 = vadd.f32 %v619, 0.0
  %v624 = vadd.f32 %v620, 0.0
  %v625 = vld [vmem:[%s3 + $0x1] sm:$0x1]
  %v626 = vlaneseq
  %v627 = vshrl.u32 %v626, 7
  %v628 = vsub.s32 0, %v627
  %v629 = vrot.slane %v625, %v628
  %v630 = vmul.f32 %v600, %v629
  %v631 = vmul.f32 %v601, %v629
  %v632 = vmul.f32 %v602, %v629
  %v633 = vmul.f32 %v603, %v629
  %v634 = vadd.f32 %v621, %v630
  %v635 = vadd.f32 %v622, %v631
  %v636 = vadd.f32 %v623, %v632
  %v637 = vadd.f32 %v624, %v633
  %638 = vrot.lane.b32.xlu0 %v600, 120
  %v639 = vpop.permute.xlu0 %638
  %640 = vrot.lane.b32.xlu0 %v601, 120
  %v641 = vpop.permute.xlu0 %640
  %642 = vrot.lane.b32.xlu0 %v602, 120
  %v643 = vpop.permute.xlu0 %642
  %644 = vrot.lane.b32.xlu0 %v603, 120
  %v645 = vpop.permute.xlu0 %644
  %v646 = vld [vmem:[%s3 + $0x2] sm:$0x1]
  %v647 = vlaneseq
  %v648 = vshrl.u32 %v647, 7
  %v649 = vsub.s32 0, %v648
  %v650 = vrot.slane %v646, %v649
  %v651 = vmul.f32 %v639, %v650
  %v652 = vmul.f32 %v641, %v650
  %v653 = vmul.f32 %v643, %v650
  %v654 = vmul.f32 %v645, %v650
  %v655 = vadd.f32 %v634, %v651
  %v656 = vadd.f32 %v635, %v652
  %v657 = vadd.f32 %v636, %v653
  %v658 = vadd.f32 %v637, %v654
  %v659 = vld [vmem:[#allocation2 + $0x1] sm:$0xff]
  %v660 = vld [vmem:[#allocation2 + $0x9] sm:$0xff]
  %v661 = vld [vmem:[#allocation2 + $0x19] sm:$0xff]
  %v662 = vld [vmem:[#allocation2 + $0x21] sm:$0xff]
  %663 = vrot.lane.b32.xlu0 %v659, 8
  %v664 = vpop.permute.xlu0 %663
  %665 = vrot.lane.b32.xlu0 %v660, 8
  %v666 = vpop.permute.xlu0 %665
  %667 = vrot.lane.b32.xlu0 %v661, 8
  %v668 = vpop.permute.xlu0 %667
  %669 = vrot.lane.b32.xlu0 %v662, 8
  %v670 = vpop.permute.xlu0 %669
  %s671 = scalar_lea.vmem %s3, 4
  %v672 = vld [vmem:[%s671] sm:$0x1]
  %v673 = vlaneseq
  %v674 = vshrl.u32 %v673, 7
  %v675 = vsub.s32 0, %v674
  %v676 = vrot.slane %v672, %v675
  %v677 = vmul.f32 %v664, %v676
  %v678 = vmul.f32 %v666, %v676
  %v679 = vmul.f32 %v668, %v676
  %v680 = vmul.f32 %v670, %v676
  %v681 = vadd.f32 %v655, %v677
  %v682 = vadd.f32 %v656, %v678
  %v683 = vadd.f32 %v657, %v679
  %v684 = vadd.f32 %v658, %v680
  %v685 = vld [vmem:[%s671 + $0x1] sm:$0x1]
  %v686 = vlaneseq
  %v687 = vshrl.u32 %v686, 7
  %v688 = vsub.s32 0, %v687
  %v689 = vrot.slane %v685, %v688
  %v690 = vmul.f32 %v659, %v689
  %v691 = vmul.f32 %v660, %v689
  %v692 = vmul.f32 %v661, %v689
  %v693 = vmul.f32 %v662, %v689
  %v694 = vadd.f32 %v681, %v690
  %v695 = vadd.f32 %v682, %v691
  %v696 = vadd.f32 %v683, %v692
  %v697 = vadd.f32 %v684, %v693
  %698 = vrot.lane.b32.xlu0 %v659, 120
  %v699 = vpop.permute.xlu0 %698
  %700 = vrot.lane.b32.xlu0 %v660, 120
  %v701 = vpop.permute.xlu0 %700
  %702 = vrot.lane.b32.xlu0 %v661, 120
  %v703 = vpop.permute.xlu0 %702
  %704 = vrot.lane.b32.xlu0 %v662, 120
  %v705 = vpop.permute.xlu0 %704
  %v706 = vld [vmem:[%s671 + $0x2] sm:$0x1]
  %v707 = vlaneseq
  %v708 = vshrl.u32 %v707, 7
  %v709 = vsub.s32 0, %v708
  %v710 = vrot.slane %v706, %v709
  %v711 = vmul.f32 %v699, %v710
  %v712 = vmul.f32 %v701, %v710
  %v713 = vmul.f32 %v703, %v710
  %v714 = vmul.f32 %v705, %v710
  %v715 = vadd.f32 %v694, %v711
  %v716 = vadd.f32 %v695, %v712
  %v717 = vadd.f32 %v696, %v713
  %v718 = vadd.f32 %v697, %v714
  %v719 = vld [vmem:[#allocation2 + $0x2] sm:$0xff]
  %v720 = vld [vmem:[#allocation2 + $0xa] sm:$0xff]
  %v721 = vld [vmem:[#allocation2 + $0x1a] sm:$0xff]
  %v722 = vld [vmem:[#allocation2 + $0x22] sm:$0xff]
  %723 = vrot.lane.b32.xlu0 %v719, 8
  %v724 = vpop.permute.xlu0 %723
  %725 = vrot.lane.b32.xlu0 %v720, 8
  %v726 = vpop.permute.xlu0 %725
  %727 = vrot.lane.b32.xlu0 %v721, 8
  %v728 = vpop.permute.xlu0 %727
  %729 = vrot.lane.b32.xlu0 %v722, 8
  %v730 = vpop.permute.xlu0 %729
  %s731 = scalar_lea.vmem %s3, 8
  %v732 = vld [vmem:[%s731] sm:$0x1]
  %v733 = vlaneseq
  %v734 = vshrl.u32 %v733, 7
  %v735 = vsub.s32 0, %v734
  %v736 = vrot.slane %v732, %v735
  %v737 = vmul.f32 %v724, %v736
  %v738 = vmul.f32 %v726, %v736
  %v739 = vmul.f32 %v728, %v736
  %v740 = vmul.f32 %v730, %v736
  %v741 = vadd.f32 %v715, %v737
  %v742 = vadd.f32 %v716, %v738
  %v743 = vadd.f32 %v717, %v739
  %v744 = vadd.f32 %v718, %v740
  %v745 = vld [vmem:[%s731 + $0x1] sm:$0x1]
  %v746 = vlaneseq
  %v747 = vshrl.u32 %v746, 7
  %v748 = vsub.s32 0, %v747
  %v749 = vrot.slane %v745, %v748
  %v750 = vmul.f32 %v719, %v749
  %v751 = vmul.f32 %v720, %v749
  %v752 = vmul.f32 %v721, %v749
  %v753 = vmul.f32 %v722, %v749
  %v754 = vadd.f32 %v741, %v750
  %v755 = vadd.f32 %v742, %v751
  %v756 = vadd.f32 %v743, %v752
  %v757 = vadd.f32 %v744, %v753
  %758 = vrot.lane.b32.xlu0 %v719, 120
  %v759 = vpop.permute.xlu0 %758
  %760 = vrot.lane.b32.xlu0 %v720, 120
  %v761 = vpop.permute.xlu0 %760
  %762 = vrot.lane.b32.xlu0 %v721, 120
  %v763 = vpop.permute.xlu0 %762
  %764 = vrot.lane.b32.xlu0 %v722, 120
  %v765 = vpop.permute.xlu0 %764
  %v766 = vld [vmem:[%s731 + $0x2] sm:$0x1]
  %v767 = vlaneseq
  %v768 = vshrl.u32 %v767, 7
  %v769 = vsub.s32 0, %v768
  %v770 = vrot.slane %v766, %v769
  %v771 = vmul.f32 %v759, %v770
  %v772 = vmul.f32 %v761, %v770
  %v773 = vmul.f32 %v763, %v770
  %v774 = vmul.f32 %v765, %v770
  %v775 = vadd.f32 %v754, %v771
  %v776 = vadd.f32 %v755, %v772
  %v777 = vadd.f32 %v756, %v773
  %v778 = vadd.f32 %v757, %v774
  %779 = vrot.lane.b32.xlu0 %v775, 121
  %v780 = vpop.permute.xlu0 %779
  %781 = vrot.lane.b32.xlu0 %v776, 121
  %v782 = vpop.permute.xlu0 %781
  %783 = vrot.lane.b32.xlu0 %v777, 121
  %v784 = vpop.permute.xlu0 %783
  %785 = vrot.lane.b32.xlu0 %v778, 121
  %v786 = vpop.permute.xlu0 %785
  %v787 = vld [vmem:[%s4] sm:$0x1]
  %v788 = vlaneseq
  %v789 = vshrl.u32 %v788, 7
  %v790 = vsub.s32 0, %v789
  %v791 = vrot.slane %v787, %v790
  %v792 = vmul.f32 %v780, %v791
  %v793 = vmul.f32 %v782, %v791
  %v794 = vmul.f32 %v784, %v791
  %v795 = vmul.f32 %v786, %v791
  %v796 = vadd.f32 %v792, 0.0
  %v797 = vadd.f32 %v793, 0.0
  %v798 = vadd.f32 %v794, 0.0
  %v799 = vadd.f32 %v795, 0.0
  %800 = vrot.lane.b32.xlu0 %v775, 122
  %v801 = vpop.permute.xlu0 %800
  %802 = vrot.lane.b32.xlu0 %v776, 122
  %v803 = vpop.permute.xlu0 %802
  %804 = vrot.lane.b32.xlu0 %v777, 122
  %v805 = vpop.permute.xlu0 %804
  %806 = vrot.lane.b32.xlu0 %v778, 122
  %v807 = vpop.permute.xlu0 %806
  %v808 = vld [vmem:[%s4 + $0x1] sm:$0x1]
  %v809 = vlaneseq
  %v810 = vshrl.u32 %v809, 7
  %v811 = vsub.s32 0, %v810
  %v812 = vrot.slane %v808, %v811
  %v813 = vmul.f32 %v801, %v812
  %v814 = vmul.f32 %v803, %v812
  %v815 = vmul.f32 %v805, %v812
  %v816 = vmul.f32 %v807, %v812
  %v817 = vadd.f32 %v796, %v813
  %v818 = vadd.f32 %v797, %v814
  %v819 = vadd.f32 %v798, %v815
  %v820 = vadd.f32 %v799, %v816
  %821 = vrot.lane.b32.xlu0 %v775, 123
  %v822 = vpop.permute.xlu0 %821
  %823 = vrot.lane.b32.xlu0 %v776, 123
  %v824 = vpop.permute.xlu0 %823
  %825 = vrot.lane.b32.xlu0 %v777, 123
  %v826 = vpop.permute.xlu0 %825
  %827 = vrot.lane.b32.xlu0 %v778, 123
  %v828 = vpop.permute.xlu0 %827
  %v829 = vld [vmem:[%s4 + $0x2] sm:$0x1]
  %v830 = vlaneseq
  %v831 = vshrl.u32 %v830, 7
  %v832 = vsub.s32 0, %v831
  %v833 = vrot.slane %v829, %v832
  %v834 = vmul.f32 %v822, %v833
  %v835 = vmul.f32 %v824, %v833
  %v836 = vmul.f32 %v826, %v833
  %v837 = vmul.f32 %v828, %v833
  %v838 = vadd.f32 %v817, %v834
  %v839 = vadd.f32 %v818, %v835
  %v840 = vadd.f32 %v819, %v836
  %v841 = vadd.f32 %v820, %v837
  %842 = vrot.lane.b32.xlu0 %v775, 124
  %v843 = vpop.permute.xlu0 %842
  %844 = vrot.lane.b32.xlu0 %v776, 124
  %v845 = vpop.permute.xlu0 %844
  %846 = vrot.lane.b32.xlu0 %v777, 124
  %v847 = vpop.permute.xlu0 %846
  %848 = vrot.lane.b32.xlu0 %v778, 124
  %v849 = vpop.permute.xlu0 %848
  %v850 = vld [vmem:[%s4 + $0x3] sm:$0x1]
  %v851 = vlaneseq
  %v852 = vshrl.u32 %v851, 7
  %v853 = vsub.s32 0, %v852
  %v854 = vrot.slane %v850, %v853
  %v855 = vmul.f32 %v843, %v854
  %v856 = vmul.f32 %v845, %v854
  %v857 = vmul.f32 %v847, %v854
  %v858 = vmul.f32 %v849, %v854
  %v859 = vadd.f32 %v838, %v855
  %v860 = vadd.f32 %v839, %v856
  %v861 = vadd.f32 %v840, %v857
  %v862 = vadd.f32 %v841, %v858
  %863 = vrot.lane.b32.xlu0 %v775, 125
  %v864 = vpop.permute.xlu0 %863
  %865 = vrot.lane.b32.xlu0 %v776, 125
  %v866 = vpop.permute.xlu0 %865
  %867 = vrot.lane.b32.xlu0 %v777, 125
  %v868 = vpop.permute.xlu0 %867
  %869 = vrot.lane.b32.xlu0 %v778, 125
  %v870 = vpop.permute.xlu0 %869
  %v871 = vld [vmem:[%s4 + $0x4] sm:$0x1]
  %v872 = vlaneseq
  %v873 = vshrl.u32 %v872, 7
  %v874 = vsub.s32 0, %v873
  %v875 = vrot.slane %v871, %v874
  %v876 = vmul.f32 %v864, %v875
  %v877 = vmul.f32 %v866, %v875
  %v878 = vmul.f32 %v868, %v875
  %v879 = vmul.f32 %v870, %v875
  %v880 = vadd.f32 %v859, %v876
  %v881 = vadd.f32 %v860, %v877
  %v882 = vadd.f32 %v861, %v878
  %v883 = vadd.f32 %v862, %v879
  %884 = vrot.lane.b32.xlu0 %v775, 126
  %v885 = vpop.permute.xlu0 %884
  %886 = vrot.lane.b32.xlu0 %v776, 126
  %v887 = vpop.permute.xlu0 %886
  %888 = vrot.lane.b32.xlu0 %v777, 126
  %v889 = vpop.permute.xlu0 %888
  %890 = vrot.lane.b32.xlu0 %v778, 126
  %v891 = vpop.permute.xlu0 %890
  %v892 = vld [vmem:[%s4 + $0x5] sm:$0x1]
  %v893 = vlaneseq
  %v894 = vshrl.u32 %v893, 7
  %v895 = vsub.s32 0, %v894
  %v896 = vrot.slane %v892, %v895
  %v897 = vmul.f32 %v885, %v896
  %v898 = vmul.f32 %v887, %v896
  %v899 = vmul.f32 %v889, %v896
  %v900 = vmul.f32 %v891, %v896
  %v901 = vadd.f32 %v880, %v897
  %v902 = vadd.f32 %v881, %v898
  %v903 = vadd.f32 %v882, %v899
  %v904 = vadd.f32 %v883, %v900
  %905 = vrot.lane.b32.xlu0 %v775, 127
  %v906 = vpop.permute.xlu0 %905
  %907 = vrot.lane.b32.xlu0 %v776, 127
  %v908 = vpop.permute.xlu0 %907
  %909 = vrot.lane.b32.xlu0 %v777, 127
  %v910 = vpop.permute.xlu0 %909
  %911 = vrot.lane.b32.xlu0 %v778, 127
  %v912 = vpop.permute.xlu0 %911
  %v913 = vld [vmem:[%s4 + $0x6] sm:$0x1]
  %v914 = vlaneseq
  %v915 = vshrl.u32 %v914, 7
  %v916 = vsub.s32 0, %v915
  %v917 = vrot.slane %v913, %v916
  %v918 = vmul.f32 %v906, %v917
  %v919 = vmul.f32 %v908, %v917
  %v920 = vmul.f32 %v910, %v917
  %v921 = vmul.f32 %v912, %v917
  %v922 = vadd.f32 %v901, %v918
  %v923 = vadd.f32 %v902, %v919
  %v924 = vadd.f32 %v903, %v920
  %v925 = vadd.f32 %v904, %v921
  %v926 = vld [vmem:[%s4 + $0x7] sm:$0x1]
  %v927 = vlaneseq
  %v928 = vshrl.u32 %v927, 7
  %v929 = vsub.s32 0, %v928
  %v930 = vrot.slane %v926, %v929
  %v931 = vmul.f32 %v775, %v930
  %v932 = vmul.f32 %v776, %v930
  %v933 = vmul.f32 %v777, %v930
  %v934 = vmul.f32 %v778, %v930
  %v935 = vadd.f32 %v922, %v931
  %v936 = vadd.f32 %v923, %v932
  %v937 = vadd.f32 %v924, %v933
  %v938 = vadd.f32 %v925, %v934
  %939 = vrot.lane.b32.xlu0 %v775, 1
  %v940 = vpop.permute.xlu0 %939
  %941 = vrot.lane.b32.xlu0 %v776, 1
  %v942 = vpop.permute.xlu0 %941
  %943 = vrot.lane.b32.xlu0 %v777, 1
  %v944 = vpop.permute.xlu0 %943
  %945 = vrot.lane.b32.xlu0 %v778, 1
  %v946 = vpop.permute.xlu0 %945
  %v947 = vld [vmem:[%s4 + $0x8] sm:$0x1]
  %v948 = vlaneseq
  %v949 = vshrl.u32 %v948, 7
  %v950 = vsub.s32 0, %v949
  %v951 = vrot.slane %v947, %v950
  %v952 = vmul.f32 %v940, %v951
  %v953 = vmul.f32 %v942, %v951
  %v954 = vmul.f32 %v944, %v951
  %v955 = vmul.f32 %v946, %v951
  %v956 = vadd.f32 %v935, %v952
  %v957 = vadd.f32 %v936, %v953
  %v958 = vadd.f32 %v937, %v954
  %v959 = vadd.f32 %v938, %v955
  %960 = vrot.lane.b32.xlu0 %v775, 2
  %v961 = vpop.permute.xlu0 %960
  %962 = vrot.lane.b32.xlu0 %v776, 2
  %v963 = vpop.permute.xlu0 %962
  %964 = vrot.lane.b32.xlu0 %v777, 2
  %v965 = vpop.permute.xlu0 %964
  %966 = vrot.lane.b32.xlu0 %v778, 2
  %v967 = vpop.permute.xlu0 %966
  %v968 = vld [vmem:[%s4 + $0x9] sm:$0x1]
  %v969 = vlaneseq
  %v970 = vshrl.u32 %v969, 7
  %v971 = vsub.s32 0, %v970
  %v972 = vrot.slane %v968, %v971
  %v973 = vmul.f32 %v961, %v972
  %v974 = vmul.f32 %v963, %v972
  %v975 = vmul.f32 %v965, %v972
  %v976 = vmul.f32 %v967, %v972
  %v977 = vadd.f32 %v956, %v973
  %v978 = vadd.f32 %v957, %v974
  %v979 = vadd.f32 %v958, %v975
  %v980 = vadd.f32 %v959, %v976
  %981 = vrot.lane.b32.xlu0 %v775, 3
  %v982 = vpop.permute.xlu0 %981
  %983 = vrot.lane.b32.xlu0 %v776, 3
  %v984 = vpop.permute.xlu0 %983
  %985 = vrot.lane.b32.xlu0 %v777, 3
  %v986 = vpop.permute.xlu0 %985
  %987 = vrot.lane.b32.xlu0 %v778, 3
  %v988 = vpop.permute.xlu0 %987
  %v989 = vld [vmem:[%s4 + $0xa] sm:$0x1]
  %v990 = vlaneseq
  %v991 = vshrl.u32 %v990, 7
  %v992 = vsub.s32 0, %v991
  %v993 = vrot.slane %v989, %v992
  %v994 = vmul.f32 %v982, %v993
  %v995 = vmul.f32 %v984, %v993
  %v996 = vmul.f32 %v986, %v993
  %v997 = vmul.f32 %v988, %v993
  %v998 = vadd.f32 %v977, %v994
  %v999 = vadd.f32 %v978, %v995
  %v1000 = vadd.f32 %v979, %v996
  %v1001 = vadd.f32 %v980, %v997
  %1002 = vrot.lane.b32.xlu0 %v775, 4
  %v1003 = vpop.permute.xlu0 %1002
  %1004 = vrot.lane.b32.xlu0 %v776, 4
  %v1005 = vpop.permute.xlu0 %1004
  %1006 = vrot.lane.b32.xlu0 %v777, 4
  %v1007 = vpop.permute.xlu0 %1006
  %1008 = vrot.lane.b32.xlu0 %v778, 4
  %v1009 = vpop.permute.xlu0 %1008
  %v1010 = vld [vmem:[%s4 + $0xb] sm:$0x1]
  %v1011 = vlaneseq
  %v1012 = vshrl.u32 %v1011, 7
  %v1013 = vsub.s32 0, %v1012
  %v1014 = vrot.slane %v1010, %v1013
  %v1015 = vmul.f32 %v1003, %v1014
  %v1016 = vmul.f32 %v1005, %v1014
  %v1017 = vmul.f32 %v1007, %v1014
  %v1018 = vmul.f32 %v1009, %v1014
  %v1019 = vadd.f32 %v998, %v1015
  %v1020 = vadd.f32 %v999, %v1016
  %v1021 = vadd.f32 %v1000, %v1017
  %v1022 = vadd.f32 %v1001, %v1018
  %1023 = vrot.lane.b32.xlu0 %v775, 5
  %v1024 = vpop.permute.xlu0 %1023
  %1025 = vrot.lane.b32.xlu0 %v776, 5
  %v1026 = vpop.permute.xlu0 %1025
  %1027 = vrot.lane.b32.xlu0 %v777, 5
  %v1028 = vpop.permute.xlu0 %1027
  %1029 = vrot.lane.b32.xlu0 %v778, 5
  %v1030 = vpop.permute.xlu0 %1029
  %v1031 = vld [vmem:[%s4 + $0xc] sm:$0x1]
  %v1032 = vlaneseq
  %v1033 = vshrl.u32 %v1032, 7
  %v1034 = vsub.s32 0, %v1033
  %v1035 = vrot.slane %v1031, %v1034
  %v1036 = vmul.f32 %v1024, %v1035
  %v1037 = vmul.f32 %v1026, %v1035
  %v1038 = vmul.f32 %v1028, %v1035
  %v1039 = vmul.f32 %v1030, %v1035
  %v1040 = vadd.f32 %v1019, %v1036
  %v1041 = vadd.f32 %v1020, %v1037
  %v1042 = vadd.f32 %v1021, %v1038
  %v1043 = vadd.f32 %v1022, %v1039
  %1044 = vrot.lane.b32.xlu0 %v775, 6
  %v1045 = vpop.permute.xlu0 %1044
  %1046 = vrot.lane.b32.xlu0 %v776, 6
  %v1047 = vpop.permute.xlu0 %1046
  %1048 = vrot.lane.b32.xlu0 %v777, 6
  %v1049 = vpop.permute.xlu0 %1048
  %1050 = vrot.lane.b32.xlu0 %v778, 6
  %v1051 = vpop.permute.xlu0 %1050
  %v1052 = vld [vmem:[%s4 + $0xd] sm:$0x1]
  %v1053 = vlaneseq
  %v1054 = vshrl.u32 %v1053, 7
  %v1055 = vsub.s32 0, %v1054
  %v1056 = vrot.slane %v1052, %v1055
  %v1057 = vmul.f32 %v1045, %v1056
  %v1058 = vmul.f32 %v1047, %v1056
  %v1059 = vmul.f32 %v1049, %v1056
  %v1060 = vmul.f32 %v1051, %v1056
  %v1061 = vadd.f32 %v1040, %v1057
  %v1062 = vadd.f32 %v1041, %v1058
  %v1063 = vadd.f32 %v1042, %v1059
  %v1064 = vadd.f32 %v1043, %v1060
  %1065 = vrot.lane.b32.xlu0 %v775, 7
  %v1066 = vpop.permute.xlu0 %1065
  %1067 = vrot.lane.b32.xlu0 %v776, 7
  %v1068 = vpop.permute.xlu0 %1067
  %1069 = vrot.lane.b32.xlu0 %v777, 7
  %v1070 = vpop.permute.xlu0 %1069
  %1071 = vrot.lane.b32.xlu0 %v778, 7
  %v1072 = vpop.permute.xlu0 %1071
  %v1073 = vld [vmem:[%s4 + $0xe] sm:$0x1]
  %v1074 = vlaneseq
  %v1075 = vshrl.u32 %v1074, 7
  %v1076 = vsub.s32 0, %v1075
  %v1077 = vrot.slane %v1073, %v1076
  %v1078 = vmul.f32 %v1066, %v1077
  %v1079 = vmul.f32 %v1068, %v1077
  %v1080 = vmul.f32 %v1070, %v1077
  %v1081 = vmul.f32 %v1072, %v1077
  %v1082 = vadd.f32 %v1061, %v1078
  %v1083 = vadd.f32 %v1062, %v1079
  %v1084 = vadd.f32 %v1063, %v1080
  %v1085 = vadd.f32 %v1064, %v1081
  %v1086 = vadd.f32 %v1082, %v1083
  %v1087 = vadd.f32 %v1086, %v1084
  %v1088 = vadd.f32 %v1087, %v1085
  %v1089 = vrot.slane %v1088, 4
  %v1090 = vadd.f32 %v1088, %v1089
  %v1091 = vrot.slane %v1090, 2
  %v1092 = vadd.f32 %v1090, %v1091
  %v1093 = vrot.slane %v1092, 1
  %v1094 = vadd.f32 %v1092, %v1093
  %1095 = vrot.lane.b32.xlu0 %v1094, 8
  %v1096 = vpop.permute.xlu0 %1095
  %v1097 = vadd.f32 %v1094, %v1096
  %1098 = vrot.lane.b32.xlu0 %v1097, 16
  %v1099 = vpop.permute.xlu0 %1098
  %v1100 = vadd.f32 %v1097, %v1099
  %1101 = vrot.lane.b32.xlu0 %v1100, 32
  %v1102 = vpop.permute.xlu0 %1101
  %v1103 = vadd.f32 %v1100, %v1102
  %1104 = vrot.lane.b32.xlu0 %v1103, 64
  %v1105 = vpop.permute.xlu0 %1104
  %v1106 = vadd.f32 %v1103, %v1105
  %v1107 = vmul.f32 %v1106, 0.001953125
  %v1108 = vlaneseq
  %v1109 = vshrl.u32 %v1108, 7
  %v1110 = vsub.s32 0, %v1109
  %v1111 = vrot.slane %v1107, %v1110
  %v1112 = vsub.f32 %v1082, %v1111
  %v1113 = vsub.f32 %v1083, %v1111
  %v1114 = vsub.f32 %v1084, %v1111
  %v1115 = vsub.f32 %v1085, %v1111
  %v1116 = vmul.f32 %v1112, %v1112
  %v1117 = vmul.f32 %v1113, %v1113
  %v1118 = vmul.f32 %v1114, %v1114
  %v1119 = vmul.f32 %v1115, %v1115
  %v1120 = vadd.f32 %v1116, %v1117
  %v1121 = vadd.f32 %v1120, %v1118
  %v1122 = vadd.f32 %v1121, %v1119
  %v1123 = vrot.slane %v1122, 4
  %v1124 = vadd.f32 %v1122, %v1123
  %v1125 = vrot.slane %v1124, 2
  %v1126 = vadd.f32 %v1124, %v1125
  %v1127 = vrot.slane %v1126, 1
  %v1128 = vadd.f32 %v1126, %v1127
  %1129 = vrot.lane.b32.xlu0 %v1128, 8
  %v1130 = vpop.permute.xlu0 %1129
  %v1131 = vadd.f32 %v1128, %v1130
  %1132 = vrot.lane.b32.xlu0 %v1131, 16
  %v1133 = vpop.permute.xlu0 %1132
  %v1134 = vadd.f32 %v1131, %v1133
  %1135 = vrot.lane.b32.xlu0 %v1134, 32
  %v1136 = vpop.permute.xlu0 %1135
  %v1137 = vadd.f32 %v1134, %v1136
  %1138 = vrot.lane.b32.xlu0 %v1137, 64
  %v1139 = vpop.permute.xlu0 %1138
  %v1140 = vadd.f32 %v1137, %v1139
  %v1141 = vmul.f32 %v1140, 0.001953125
  %v1142 = vadd.f32 %v1141, 1e-05
  %v1143 = vrsqrt.pop %v1142
  %v1144 = vlaneseq
  %v1145 = vshrl.u32 %v1144, 7
  %v1146 = vsub.s32 0, %v1145
  %v1147 = vrot.slane %v1143, %v1146
  %v1148 = vmul.f32 %v1112, %v1147
  %v1149 = vmul.f32 %v1113, %v1147
  %v1150 = vmul.f32 %v1114, %v1147
  %v1151 = vmul.f32 %v1115, %v1147
  %1152 = vst [vmem:[%s5] sm:$0xff] %v1148
  %1153 = vst [vmem:[%s5 + $0x8] sm:$0xff] %v1149
  %1154 = vst [vmem:[%s5 + $0x10] sm:$0xff] %v1150
  %1155 = vst [vmem:[%s5 + $0x18] sm:$0xff] %v1151
  // Predicated region
  $region22: #{a_call__.1} parent=0 // pred_check
    _
  $region23: #{a_call__.1} parent=0 // pred_check_branch
    %1157 = sbr.rel (0) target = $region25
  $region24: #{a_call__.1} parent=0 // pred_region
    _
  $region25: #{a_call__.1} parent=0 // pred_fallthru
    _
  // Predicated region
  $region26: #{a_call__.1} parent=0 // pred_check
    _
  $region27: #{a_call__.1} parent=0 // pred_check_branch
    %1159 = sbr.rel (0) target = $region29
  $region28: #{a_call__.1} parent=0 // pred_region
    _
  $region29: #{a_call__.1} parent=0 // pred_fallthru
    _

</llo_original>
